<compile_context>
chip_gen: v7x
topology: tpu7x:2x2x1
jax: 0.10.0
libtpu: 0.0.40
codegen_flags: <defaults>
</compile_context>

<pallas_src>
import functools
import math

import jax
import jax.numpy as jnp
from jax.experimental import pallas as pl
from jax.experimental.pallas import tpu as pltpu


# Safe scoped-VMEM request on v5e/v6e (128 MiB physical) and v7x (64 MiB).
_VMEM_LIMIT = 48 * 1024 * 1024


# ------------------------ Fused per-batch layer kernel --------------------- #
def _fused_layer_kernel(xq_ref, xk_ref, xv_ref,
                        wq_ref, bq_ref, wk_ref, bk_ref, wv_ref, bv_ref,
                        wo_ref, bo_ref, o_ref):
    """One batch element: QKV projections + all-heads attention + out proj.

    Block shapes:
      xq (1, L, D)          xk/xv (1, S, D)
      wq/wk/wv (H, D, E)    bq/bk/bv (H, 1, E)
      wo (H, E, D)          bo (1, D)
      o  (1, L, D)
    """
    H, D, E = wq_ref.shape
    L = xq_ref.shape[1]
    S = xk_ref.shape[1]
    scale = 1.0 / math.sqrt(E)
    bf = jnp.bfloat16

    # Broadcast activations over heads so every matmul below is a plain
    # leading-batch dot_general on the MXU (no in-kernel reshape/transpose).
    xq = jnp.broadcast_to(xq_ref[0].astype(bf), (H, L, D))
    xk = jnp.broadcast_to(xk_ref[0].astype(bf), (H, S, D))
    xv = jnp.broadcast_to(xv_ref[0].astype(bf), (H, S, D))

    q = jnp.einsum("hld,hde->hle", xq, wq_ref[...].astype(bf),
                   preferred_element_type=jnp.float32) + bq_ref[...]
    k = jnp.einsum("hsd,hde->hse", xk, wk_ref[...].astype(bf),
                   preferred_element_type=jnp.float32) + bk_ref[...]
    v = jnp.einsum("hsd,hde->hse", xv, wv_ref[...].astype(bf),
                   preferred_element_type=jnp.float32) + bv_ref[...]

    # Fold 1/sqrt(E) into q (L*E multiplies instead of L*S on the scores).
    qh = (q * scale).astype(bf)
    kh = k.astype(bf)
    vh = v.astype(bf)

    scores = jnp.einsum("hle,hse->hls", qh, kh,
                        preferred_element_type=jnp.float32)      # (H, L, S)
    m = jnp.max(scores, axis=-1, keepdims=True)                  # f32 softmax
    p = jnp.exp(scores - m)
    a = p * pl.reciprocal(jnp.sum(p, axis=-1, keepdims=True), approx=True)

    ctx = jnp.einsum("hls,hse->hle", a.astype(bf), vh,
                     preferred_element_type=jnp.float32)         # (H, L, E)

    # Output projection as a head-batched matmul, then reduce over heads.
    out = jnp.einsum("hle,hed->hld", ctx.astype(bf), wo_ref[...].astype(bf),
                     preferred_element_type=jnp.float32)         # (H, L, D)
    o_ref[0] = (jnp.sum(out, axis=0) + bo_ref[...]).astype(o_ref.dtype)


def _fused_cross_attention(xq, xk, xv, wq_h, bq_h, wk_h, bk_h, wv_h, bv_h,
                           wo_h, bo2, *, n_heads):
    B, L, D = xq.shape
    S = xk.shape[1]
    H = n_heads
    E = D // H

    flops = int(B * (2 * D * D * (2 * L + 2 * S) + 4 * H * L * S * E))
    bytes_accessed = int(4 * (B * (2 * L * D + 2 * S * D) + 4 * D * D + 4 * D))
    cost = pl.CostEstimate(flops=flops, transcendentals=int(B * H * L * S),
                           bytes_accessed=bytes_accessed)

    return pl.pallas_call(
        _fused_layer_kernel,
        out_shape=jax.ShapeDtypeStruct((B, L, D), xq.dtype),
        grid=(B,),
        in_specs=[
            pl.BlockSpec((1, L, D), lambda b: (b, 0, 0)),
            pl.BlockSpec((1, S, D), lambda b: (b, 0, 0)),
            pl.BlockSpec((1, S, D), lambda b: (b, 0, 0)),
            pl.BlockSpec((H, D, E), lambda b: (0, 0, 0)),
            pl.BlockSpec((H, 1, E), lambda b: (0, 0, 0)),
            pl.BlockSpec((H, D, E), lambda b: (0, 0, 0)),
            pl.BlockSpec((H, 1, E), lambda b: (0, 0, 0)),
            pl.BlockSpec((H, D, E), lambda b: (0, 0, 0)),
            pl.BlockSpec((H, 1, E), lambda b: (0, 0, 0)),
            pl.BlockSpec((H, E, D), lambda b: (0, 0, 0)),
            pl.BlockSpec((1, D), lambda b: (0, 0)),
        ],
        out_specs=pl.BlockSpec((1, L, D), lambda b: (b, 0, 0)),
        compiler_params=pltpu.CompilerParams(
            dimension_semantics=("parallel",),
            vmem_limit_bytes=_VMEM_LIMIT),
        cost_estimate=cost,
    )(xq, xk, xv, wq_h, bq_h, wk_h, bk_h, wv_h, bv_h, wo_h, bo2)


def _fused_vmem_estimate(B, L, S, D, H, E):
    """Rough f32-bytes estimate of the fused kernel's per-step VMEM footprint."""
    act = 2 * (2 * L * D + 2 * S * D)                  # double-buffered in/out
    wts = 3 * H * D * E + 3 * H * E + H * E * D + D    # resident weights
    inter = (3 * H * L * D                              # head-broadcast acts
             + 2 * H * (L + 2 * S) * E                  # q/k/v (f32 + bf16)
             + 2 * H * L * S                            # scores + probs
             + 2 * H * L * E                            # ctx
             + H * L * D + L * D)                       # per-head out + reduced
    return 4 * (act + wts + inter)


# -------------------------- Row-tiled linear kernel ------------------------ #
def _linear_kernel(x_ref, w_ref, b_ref, o_ref):
    x = x_ref[...].astype(jnp.bfloat16)
    w = w_ref[...].astype(jnp.bfloat16)
    acc = jnp.dot(x, w, preferred_element_type=jnp.float32)
    o_ref[...] = (acc + b_ref[...]).astype(o_ref.dtype)


def linear(x2d, w, b, *, tm=512):
    """Row-tiled y = x @ W + b.  x2d: (M, K), w: (K, N), b: (N,) -> (M, N)."""
    M, K = x2d.shape
    N = w.shape[1]
    tm = M if M <= tm else tm            # full-array block when M is small
    grid_m = pl.cdiv(M, tm)
    # TODO(synk): tile K with an f32 VMEM accumulator (init/finalize via
    # pl.when, 'arbitrary' K axis) once d_model grows enough that the
    # (tm, K) + (K, N) tiles stop fitting comfortably in VMEM (esp. on v7x).
    cost = pl.CostEstimate(flops=int(2 * M * K * N), transcendentals=0,
                           bytes_accessed=int(4 * (M * K + K * N + N + M * N)))
    return pl.pallas_call(
        _linear_kernel,
        out_shape=jax.ShapeDtypeStruct((M, N), x2d.dtype),
        grid=(grid_m,),
        in_specs=[
            pl.BlockSpec((tm, K), lambda i: (i, 0)),
            pl.BlockSpec((K, N), lambda i: (0, 0)),
            pl.BlockSpec((1, N), lambda i: (0, 0)),
        ],
        out_specs=pl.BlockSpec((tm, N), lambda i: (i, 0)),
        compiler_params=pltpu.CompilerParams(
            dimension_semantics=("parallel",),
            vmem_limit_bytes=_VMEM_LIMIT),
        cost_estimate=cost,
    )(x2d, w, b.reshape(1, N))


# ---------------------- Heads-batched attention kernel --------------------- #
def _attn_heads_kernel(q_ref, k_ref, v_ref, o_ref):
    # blocks: q (1, H, L, E), k/v (1, H, S, E) -> o (1, H, L, E)
    E = q_ref.shape[-1]
    scale = 1.0 / math.sqrt(E)
    bf = jnp.bfloat16
    q = (q_ref[0] * scale).astype(bf)        # (H, L, E), scale folded into q
    k = k_ref[0].astype(bf)                  # (H, S, E)
    v = v_ref[0].astype(bf)                  # (H, S, E)

    s = jnp.einsum("hle,hse->hls", q, k, preferred_element_type=jnp.float32)
    m = jnp.max(s, axis=-1, keepdims=True)
    p = jnp.exp(s - m)
    a = p * pl.reciprocal(jnp.sum(p, axis=-1, keepdims=True), approx=True)
    o = jnp.einsum("hls,hse->hle", a.astype(bf), v,
                   preferred_element_type=jnp.float32)
    o_ref[0] = o.astype(o_ref.dtype)


def full_attention(q, k, v):
    """q: (B, H, L, E), k/v: (B, H, S, E) -> (B, H, L, E); all heads per step."""
    B, H, L, E = q.shape
    S = k.shape[2]
    # TODO(synk): for long S, add a KV grid axis with an online-softmax
    # accumulator (flash pattern) instead of the full (H, L, S) score block;
    # this matters first on v7x's 64 MiB VMEM.
    cost = pl.CostEstimate(flops=int(4 * B * H * L * S * E),
                           transcendentals=int(B * H * L * S),
                           bytes_accessed=int(4 * B * H * (2 * L * E + 2 * S * E)))
    return pl.pallas_call(
        _attn_heads_kernel,
        out_shape=jax.ShapeDtypeStruct((B, H, L, E), q.dtype),
        grid=(B,),
        in_specs=[
            pl.BlockSpec((1, H, L, E), lambda b: (b, 0, 0, 0)),
            pl.BlockSpec((1, H, S, E), lambda b: (b, 0, 0, 0)),
            pl.BlockSpec((1, H, S, E), lambda b: (b, 0, 0, 0)),
        ],
        out_specs=pl.BlockSpec((1, H, L, E), lambda b: (b, 0, 0, 0)),
        compiler_params=pltpu.CompilerParams(
            dimension_semantics=("parallel",),
            vmem_limit_bytes=_VMEM_LIMIT),
        cost_estimate=cost,
    )(q, k, v)


# ------------------------- CrossAttentionLayer ----------------------------- #
def init_params(key, d_model):
    """Deterministic init mimicking nn.Linear(d_model, d_model) shapes.

    Weights stored as (in, out) so that y = x @ W + b."""
    bound = 1.0 / math.sqrt(d_model)
    ks = jax.random.split(key, 8)
    p = {}
    for i, name in enumerate(["q", "k", "v", "o"]):
        p[f"w{name}"] = jax.random.uniform(
            ks[2 * i], (d_model, d_model), jnp.float32, -bound, bound)
        p[f"b{name}"] = jax.random.uniform(
            ks[2 * i + 1], (d_model,), jnp.float32, -bound, bound)
    return p


@functools.partial(jax.jit, static_argnames=("n_heads", "fused"))
def cross_attention_layer(params, queries, keys, values, *, n_heads, fused=None):
    """queries: (B, L, d_model), keys/values: (B, S, d_model).

    fused=None auto-selects the fused single-kernel path when its per-batch
    VMEM footprint fits comfortably; otherwise falls back to the row-tiled
    projections + heads-batched attention path.
    """
    B, L, D = queries.shape
    S = keys.shape[1]
    H = n_heads
    E = D // H

    if fused is None:
        fused = _fused_vmem_estimate(B, L, S, D, H, E) < int(0.6 * _VMEM_LIMIT)

    if fused:
        # Per-head factored weights: head h uses wq[:, h*E:(h+1)*E], etc.
        wq_h = params["wq"].reshape(D, H, E).transpose(1, 0, 2)   # (H, D, E)
        wk_h = params["wk"].reshape(D, H, E).transpose(1, 0, 2)
        wv_h = params["wv"].reshape(D, H, E).transpose(1, 0, 2)
        wo_h = params["wo"].reshape(H, E, D)                      # (H, E, D)
        bq_h = params["bq"].reshape(H, 1, E)
        bk_h = params["bk"].reshape(H, 1, E)
        bv_h = params["bv"].reshape(H, 1, E)
        bo2 = params["bo"].reshape(1, D)
        return _fused_cross_attention(queries, keys, values,
                                      wq_h, bq_h, wk_h, bk_h, wv_h, bv_h,
                                      wo_h, bo2, n_heads=H)

    # Fallback (scalable) path: row-tiled projections + heads-batched attn.
    q = linear(queries.reshape(B * L, D), params["wq"], params["bq"])
    k = linear(keys.reshape(B * S, D), params["wk"], params["bk"])
    v = linear(values.reshape(B * S, D), params["wv"], params["bv"])
    qh = jnp.transpose(q.reshape(B, L, H, E), (0, 2, 1, 3))
    kh = jnp.transpose(k.reshape(B, S, H, E), (0, 2, 1, 3))
    vh = jnp.transpose(v.reshape(B, S, H, E), (0, 2, 1, 3))
    ctx = full_attention(qh, kh, vh)                              # (B, H, L, E)
    ctx = jnp.transpose(ctx, (0, 2, 1, 3)).reshape(B * L, D)
    out = linear(ctx, params["wo"], params["bo"])
    return out.reshape(B, L, D)


# Pure-JAX reference (mirrors the PyTorch FullAttention path).
def reference(params, queries, keys, values, n_heads):
    B, L, D = queries.shape
    S = keys.shape[1]
    H = n_heads
    E = D // H
    q = (queries @ params["wq"] + params["bq"]).reshape(B, L, H, E)
    k = (keys @ params["wk"] + params["bk"]).reshape(B, S, H, E)
    v = (values @ params["wv"] + params["bv"]).reshape(B, S, H, E)
    scale = 1.0 / math.sqrt(E)
    scores = jnp.einsum("blhe,bshe->bhls", q, k)
    a = jax.nn.softmax(scale * scores, axis=-1)
    out = jnp.einsum("bhls,bshd->blhd", a, v).reshape(B, L, D)
    return out @ params["wo"] + params["bo"]


if __name__ == "__main__":
    B, L, S = 2, 8, 8
    d_model, n_heads = 32, 4

    key = jax.random.PRNGKey(0)
    kq, kk, kv, kp = jax.random.split(key, 4)
    queries = jax.random.normal(kq, (B, L, d_model), jnp.float32)
    keys_in = jax.random.normal(kk, (B, S, d_model), jnp.float32)
    values = jax.random.normal(kv, (B, S, d_model), jnp.float32)
    params = init_params(kp, d_model)

    out_fused = cross_attention_layer(params, queries, keys_in, values,
                                      n_heads=n_heads, fused=True)
    out_tiled = cross_attention_layer(params, queries, keys_in, values,
                                      n_heads=n_heads, fused=False)
    out_fused, out_tiled = jax.block_until_ready((out_fused, out_tiled))

    ref = reference(params, queries, keys_in, values, n_heads)
    assert out_fused.shape == (B, L, d_model)
    assert out_tiled.shape == (B, L, d_model)
    # bf16 MXU inputs with f32 accumulation -> relaxed tolerance vs f32 ref.
    assert jnp.allclose(out_fused, ref, atol=5e-2, rtol=5e-2), "fused mismatch"
    assert jnp.allclose(out_tiled, ref, atol=5e-2, rtol=5e-2), "tiled mismatch"

    print("KERNEL_OK")
</pallas_src>

<mosaic_0001>
module attributes {stable_mosaic.version = 11 : i64} {
  func.func @_fused_layer_kernel(%arg0: i32, %arg1: memref<1x8x32xf32, #tpu.memory_space<vmem>>, %arg2: memref<1x8x32xf32, #tpu.memory_space<vmem>>, %arg3: memref<1x8x32xf32, #tpu.memory_space<vmem>>, %arg4: memref<4x32x8xf32, #tpu.memory_space<vmem>>, %arg5: memref<4x1x8xf32, #tpu.memory_space<vmem>>, %arg6: memref<4x32x8xf32, #tpu.memory_space<vmem>>, %arg7: memref<4x1x8xf32, #tpu.memory_space<vmem>>, %arg8: memref<4x32x8xf32, #tpu.memory_space<vmem>>, %arg9: memref<4x1x8xf32, #tpu.memory_space<vmem>>, %arg10: memref<4x8x32xf32, #tpu.memory_space<vmem>>, %arg11: memref<1x32xf32, #tpu.memory_space<vmem>>, %arg12: memref<1x8x32xf32, #tpu.memory_space<vmem>>) attributes {dimension_semantics = [#tpu.dimension_semantics<parallel>], iteration_bounds = array<i64: 2>, scalar_prefetch = 0 : i64, scratch_operands = 0 : i64, tpu.core_type = #tpu.core_type<tc>, window_params = [{transform_indices = @transform_0, window_bounds = array<i64: 1, 8, 32>}, {transform_indices = @transform_1, window_bounds = array<i64: 1, 8, 32>}, {transform_indices = @transform_2, window_bounds = array<i64: 1, 8, 32>}, {pipeline_mode = #tpu.pipeline_mode<synchronous>, transform_indices = @transform_3, window_bounds = array<i64: 4, 32, 8>}, {pipeline_mode = #tpu.pipeline_mode<synchronous>, transform_indices = @transform_4, window_bounds = array<i64: 4, 1, 8>}, {pipeline_mode = #tpu.pipeline_mode<synchronous>, transform_indices = @transform_5, window_bounds = array<i64: 4, 32, 8>}, {pipeline_mode = #tpu.pipeline_mode<synchronous>, transform_indices = @transform_6, window_bounds = array<i64: 4, 1, 8>}, {pipeline_mode = #tpu.pipeline_mode<synchronous>, transform_indices = @transform_7, window_bounds = array<i64: 4, 32, 8>}, {pipeline_mode = #tpu.pipeline_mode<synchronous>, transform_indices = @transform_8, window_bounds = array<i64: 4, 1, 8>}, {pipeline_mode = #tpu.pipeline_mode<synchronous>, transform_indices = @transform_9, window_bounds = array<i64: 4, 8, 32>}, {pipeline_mode = #tpu.pipeline_mode<synchronous>, transform_indices = @transform_10, window_bounds = array<i64: 1, 32>}, {transform_indices = @transform_11, window_bounds = array<i64: 1, 8, 32>}]} {
    %c0 = arith.constant 0 : index
    %c0_0 = arith.constant 0 : index
    %c0_1 = arith.constant 0 : index
    %0 = vector.load %arg1[%c0, %c0_0, %c0_1] : memref<1x8x32xf32, #tpu.memory_space<vmem>>, vector<1x8x32xf32>
    %1 = vector.shape_cast %0 : vector<1x8x32xf32> to vector<8x32xf32>
    %2 = arith.truncf %1 : vector<8x32xf32> to vector<8x32xbf16>
    %3 = vector.shape_cast %2 : vector<8x32xbf16> to vector<1x8x32xbf16>
    %4 = vector.broadcast %3 : vector<1x8x32xbf16> to vector<4x8x32xbf16>
    %c0_2 = arith.constant 0 : index
    %c0_3 = arith.constant 0 : index
    %c0_4 = arith.constant 0 : index
    %5 = vector.load %arg2[%c0_2, %c0_3, %c0_4] : memref<1x8x32xf32, #tpu.memory_space<vmem>>, vector<1x8x32xf32>
    %6 = vector.shape_cast %5 : vector<1x8x32xf32> to vector<8x32xf32>
    %7 = arith.truncf %6 : vector<8x32xf32> to vector<8x32xbf16>
    %8 = vector.shape_cast %7 : vector<8x32xbf16> to vector<1x8x32xbf16>
    %9 = vector.broadcast %8 : vector<1x8x32xbf16> to vector<4x8x32xbf16>
    %c0_5 = arith.constant 0 : index
    %c0_6 = arith.constant 0 : index
    %c0_7 = arith.constant 0 : index
    %10 = vector.load %arg3[%c0_5, %c0_6, %c0_7] : memref<1x8x32xf32, #tpu.memory_space<vmem>>, vector<1x8x32xf32>
    %11 = vector.shape_cast %10 : vector<1x8x32xf32> to vector<8x32xf32>
    %12 = arith.truncf %11 : vector<8x32xf32> to vector<8x32xbf16>
    %13 = vector.shape_cast %12 : vector<8x32xbf16> to vector<1x8x32xbf16>
    %14 = vector.broadcast %13 : vector<1x8x32xbf16> to vector<4x8x32xbf16>
    %c0_8 = arith.constant 0 : index
    %c0_9 = arith.constant 0 : index
    %c0_10 = arith.constant 0 : index
    %15 = vector.load %arg4[%c0_8, %c0_9, %c0_10] : memref<4x32x8xf32, #tpu.memory_space<vmem>>, vector<4x32x8xf32>
    %16 = arith.truncf %15 : vector<4x32x8xf32> to vector<4x32x8xbf16>
    "tpu.trace_start"() <{level = 10 : i32, message = "hld,hde->hle"}> : () -> ()
    %cst = arith.constant dense<0.000000e+00> : vector<4x8x8xf32>
    %17 = tpu.matmul %4, %16, %cst {dimension_numbers = #tpu.dot_dimension_numbers<[2], [1], [1], [2], [0, 0, 0, 1, 1, 2], [0], [0]>} : vector<4x8x32xbf16>, vector<4x32x8xbf16>, vector<4x8x8xf32> -> vector<4x8x8xf32>
    "tpu.trace_stop"() : () -> ()
    %c0_11 = arith.constant 0 : index
    %c0_12 = arith.constant 0 : index
    %c0_13 = arith.constant 0 : index
    %18 = vector.load %arg5[%c0_11, %c0_12, %c0_13] : memref<4x1x8xf32, #tpu.memory_space<vmem>>, vector<4x1x8xf32>
    %19 = vector.broadcast %18 : vector<4x1x8xf32> to vector<4x8x8xf32>
    %20 = arith.addf %17, %19 : vector<4x8x8xf32>
    %c0_14 = arith.constant 0 : index
    %c0_15 = arith.constant 0 : index
    %c0_16 = arith.constant 0 : index
    %21 = vector.load %arg6[%c0_14, %c0_15, %c0_16] : memref<4x32x8xf32, #tpu.memory_space<vmem>>, vector<4x32x8xf32>
    %22 = arith.truncf %21 : vector<4x32x8xf32> to vector<4x32x8xbf16>
    "tpu.trace_start"() <{level = 10 : i32, message = "hsd,hde->hse"}> : () -> ()
    %cst_17 = arith.constant dense<0.000000e+00> : vector<4x8x8xf32>
    %23 = tpu.matmul %9, %22, %cst_17 {dimension_numbers = #tpu.dot_dimension_numbers<[2], [1], [1], [2], [0, 0, 0, 1, 1, 2], [0], [0]>} : vector<4x8x32xbf16>, vector<4x32x8xbf16>, vector<4x8x8xf32> -> vector<4x8x8xf32>
    "tpu.trace_stop"() : () -> ()
    %c0_18 = arith.constant 0 : index
    %c0_19 = arith.constant 0 : index
    %c0_20 = arith.constant 0 : index
    %24 = vector.load %arg7[%c0_18, %c0_19, %c0_20] : memref<4x1x8xf32, #tpu.memory_space<vmem>>, vector<4x1x8xf32>
    %25 = vector.broadcast %24 : vector<4x1x8xf32> to vector<4x8x8xf32>
    %26 = arith.addf %23, %25 : vector<4x8x8xf32>
    %c0_21 = arith.constant 0 : index
    %c0_22 = arith.constant 0 : index
    %c0_23 = arith.constant 0 : index
    %27 = vector.load %arg8[%c0_21, %c0_22, %c0_23] : memref<4x32x8xf32, #tpu.memory_space<vmem>>, vector<4x32x8xf32>
    %28 = arith.truncf %27 : vector<4x32x8xf32> to vector<4x32x8xbf16>
    "tpu.trace_start"() <{level = 10 : i32, message = "hsd,hde->hse"}> : () -> ()
    %cst_24 = arith.constant dense<0.000000e+00> : vector<4x8x8xf32>
    %29 = tpu.matmul %14, %28, %cst_24 {dimension_numbers = #tpu.dot_dimension_numbers<[2], [1], [1], [2], [0, 0, 0, 1, 1, 2], [0], [0]>} : vector<4x8x32xbf16>, vector<4x32x8xbf16>, vector<4x8x8xf32> -> vector<4x8x8xf32>
    "tpu.trace_stop"() : () -> ()
    %c0_25 = arith.constant 0 : index
    %c0_26 = arith.constant 0 : index
    %c0_27 = arith.constant 0 : index
    %30 = vector.load %arg9[%c0_25, %c0_26, %c0_27] : memref<4x1x8xf32, #tpu.memory_space<vmem>>, vector<4x1x8xf32>
    %31 = vector.broadcast %30 : vector<4x1x8xf32> to vector<4x8x8xf32>
    %32 = arith.addf %29, %31 : vector<4x8x8xf32>
    %cst_28 = arith.constant 0.353553385 : f32
    %33 = vector.broadcast %cst_28 : f32 to vector<4x8x8xf32>
    %34 = arith.mulf %20, %33 : vector<4x8x8xf32>
    %35 = arith.truncf %34 : vector<4x8x8xf32> to vector<4x8x8xbf16>
    %36 = arith.truncf %26 : vector<4x8x8xf32> to vector<4x8x8xbf16>
    %37 = arith.truncf %32 : vector<4x8x8xf32> to vector<4x8x8xbf16>
    "tpu.trace_start"() <{level = 10 : i32, message = "hle,hse->hls"}> : () -> ()
    %cst_29 = arith.constant dense<0.000000e+00> : vector<4x8x8xf32>
    %38 = tpu.matmul %35, %36, %cst_29 {dimension_numbers = #tpu.dot_dimension_numbers<[2], [2], [1], [1], [0, 0, 0, 1, 1, 1], [0], [0]>} : vector<4x8x8xbf16>, vector<4x8x8xbf16>, vector<4x8x8xf32> -> vector<4x8x8xf32>
    "tpu.trace_stop"() : () -> ()
    %cst_30 = arith.constant dense<0xFF800000> : vector<4x8xf32>
    %39 = vector.multi_reduction <maximumf>, %38, %cst_30 [2] : vector<4x8x8xf32> to vector<4x8xf32>
    %40 = vector.shape_cast %39 : vector<4x8xf32> to vector<4x8x1xf32>
    %41 = vector.broadcast %40 : vector<4x8x1xf32> to vector<4x8x8xf32>
    %42 = arith.subf %38, %41 : vector<4x8x8xf32>
    %43 = math.exp %42 : vector<4x8x8xf32>
    %cst_31 = arith.constant dense<0.000000e+00> : vector<4x8xf32>
    %44 = vector.multi_reduction <add>, %43, %cst_31 [2] : vector<4x8x8xf32> to vector<4x8xf32>
    %45 = vector.shape_cast %44 : vector<4x8xf32> to vector<4x8x1xf32>
    %46 = tpu.reciprocal %45 {approx = true} : vector<4x8x1xf32> -> vector<4x8x1xf32>
    %47 = vector.broadcast %46 : vector<4x8x1xf32> to vector<4x8x8xf32>
    %48 = arith.mulf %43, %47 : vector<4x8x8xf32>
    %49 = arith.truncf %48 : vector<4x8x8xf32> to vector<4x8x8xbf16>
    "tpu.trace_start"() <{level = 10 : i32, message = "hls,hse->hle"}> : () -> ()
    %cst_32 = arith.constant dense<0.000000e+00> : vector<4x8x8xf32>
    %50 = tpu.matmul %49, %37, %cst_32 {dimension_numbers = #tpu.dot_dimension_numbers<[2], [1], [1], [2], [0, 0, 0, 1, 1, 2], [0], [0]>} : vector<4x8x8xbf16>, vector<4x8x8xbf16>, vector<4x8x8xf32> -> vector<4x8x8xf32>
    "tpu.trace_stop"() : () -> ()
    %51 = arith.truncf %50 : vector<4x8x8xf32> to vector<4x8x8xbf16>
    %c0_33 = arith.constant 0 : index
    %c0_34 = arith.constant 0 : index
    %c0_35 = arith.constant 0 : index
    %52 = vector.load %arg10[%c0_33, %c0_34, %c0_35] : memref<4x8x32xf32, #tpu.memory_space<vmem>>, vector<4x8x32xf32>
    %53 = arith.truncf %52 : vector<4x8x32xf32> to vector<4x8x32xbf16>
    "tpu.trace_start"() <{level = 10 : i32, message = "hle,hed->hld"}> : () -> ()
    %cst_36 = arith.constant dense<0.000000e+00> : vector<4x8x32xf32>
    %54 = tpu.matmul %51, %53, %cst_36 {dimension_numbers = #tpu.dot_dimension_numbers<[2], [1], [1], [2], [0, 0, 0, 1, 1, 2], [0], [0]>} : vector<4x8x8xbf16>, vector<4x8x32xbf16>, vector<4x8x32xf32> -> vector<4x8x32xf32>
    "tpu.trace_stop"() : () -> ()
    %cst_37 = arith.constant dense<0.000000e+00> : vector<8x32xf32>
    %55 = vector.multi_reduction <add>, %54, %cst_37 [0] : vector<4x8x32xf32> to vector<8x32xf32>
    %c0_38 = arith.constant 0 : index
    %c0_39 = arith.constant 0 : index
    %56 = vector.load %arg11[%c0_38, %c0_39] : memref<1x32xf32, #tpu.memory_space<vmem>>, vector<1x32xf32>
    %57 = vector.broadcast %56 : vector<1x32xf32> to vector<8x32xf32>
    %58 = arith.addf %55, %57 : vector<8x32xf32>
    %c0_40 = arith.constant 0 : index
    %c0_41 = arith.constant 0 : index
    %c0_42 = arith.constant 0 : index
    %59 = vector.load %arg12[%c0_40, %c0_41, %c0_42] : memref<1x8x32xf32, #tpu.memory_space<vmem>>, vector<1x8x32xf32>
    %60 = vector.shape_cast %59 : vector<1x8x32xf32> to vector<8x32xf32>
    %61 = vector.shape_cast %58 : vector<8x32xf32> to vector<1x8x32xf32>
    tpu.vector_store %arg12[%c0_40, %c0_41, %c0_42], %61 {strides = array<i32>} : memref<1x8x32xf32, #tpu.memory_space<vmem>>, vector<1x8x32xf32>,
    return
  }
  func.func @transform_0(%arg0: i32) -> (i32, i32, i32) {
    %c0_i32 = arith.constant 0 : i32
    %c0_i32_0 = arith.constant 0 : i32
    %c0_i32_1 = arith.constant 0 : i32
    return %arg0, %c0_i32, %c0_i32_0 : i32, i32, i32
  }
  func.func @transform_1(%arg0: i32) -> (i32, i32, i32) {
    %c0_i32 = arith.constant 0 : i32
    %c0_i32_0 = arith.constant 0 : i32
    %c0_i32_1 = arith.constant 0 : i32
    return %arg0, %c0_i32, %c0_i32_0 : i32, i32, i32
  }
  func.func @transform_2(%arg0: i32) -> (i32, i32, i32) {
    %c0_i32 = arith.constant 0 : i32
    %c0_i32_0 = arith.constant 0 : i32
    %c0_i32_1 = arith.constant 0 : i32
    return %arg0, %c0_i32, %c0_i32_0 : i32, i32, i32
  }
  func.func @transform_3(%arg0: i32) -> (i32, i32, i32) {
    %c0_i32 = arith.constant 0 : i32
    %c0_i32_0 = arith.constant 0 : i32
    %c0_i32_1 = arith.constant 0 : i32
    %c0_i32_2 = arith.constant 0 : i32
    return %c0_i32, %c0_i32_0, %c0_i32_1 : i32, i32, i32
  }
  func.func @transform_4(%arg0: i32) -> (i32, i32, i32) {
    %c0_i32 = arith.constant 0 : i32
    %c0_i32_0 = arith.constant 0 : i32
    %c0_i32_1 = arith.constant 0 : i32
    %c0_i32_2 = arith.constant 0 : i32
    return %c0_i32, %c0_i32_0, %c0_i32_1 : i32, i32, i32
  }
  func.func @transform_5(%arg0: i32) -> (i32, i32, i32) {
    %c0_i32 = arith.constant 0 : i32
    %c0_i32_0 = arith.constant 0 : i32
    %c0_i32_1 = arith.constant 0 : i32
    %c0_i32_2 = arith.constant 0 : i32
    return %c0_i32, %c0_i32_0, %c0_i32_1 : i32, i32, i32
  }
  func.func @transform_6(%arg0: i32) -> (i32, i32, i32) {
    %c0_i32 = arith.constant 0 : i32
    %c0_i32_0 = arith.constant 0 : i32
    %c0_i32_1 = arith.constant 0 : i32
    %c0_i32_2 = arith.constant 0 : i32
    return %c0_i32, %c0_i32_0, %c0_i32_1 : i32, i32, i32
  }
  func.func @transform_7(%arg0: i32) -> (i32, i32, i32) {
    %c0_i32 = arith.constant 0 : i32
    %c0_i32_0 = arith.constant 0 : i32
    %c0_i32_1 = arith.constant 0 : i32
    %c0_i32_2 = arith.constant 0 : i32
    return %c0_i32, %c0_i32_0, %c0_i32_1 : i32, i32, i32
  }
  func.func @transform_8(%arg0: i32) -> (i32, i32, i32) {
    %c0_i32 = arith.constant 0 : i32
    %c0_i32_0 = arith.constant 0 : i32
    %c0_i32_1 = arith.constant 0 : i32
    %c0_i32_2 = arith.constant 0 : i32
    return %c0_i32, %c0_i32_0, %c0_i32_1 : i32, i32, i32
  }
  func.func @transform_9(%arg0: i32) -> (i32, i32, i32) {
    %c0_i32 = arith.constant 0 : i32
    %c0_i32_0 = arith.constant 0 : i32
    %c0_i32_1 = arith.constant 0 : i32
    %c0_i32_2 = arith.constant 0 : i32
    return %c0_i32, %c0_i32_0, %c0_i32_1 : i32, i32, i32
  }
  func.func @transform_10(%arg0: i32) -> (i32, i32) {
    %c0_i32 = arith.constant 0 : i32
    %c0_i32_0 = arith.constant 0 : i32
    %c0_i32_1 = arith.constant 0 : i32
    return %c0_i32, %c0_i32_0 : i32, i32
  }
  func.func @transform_11(%arg0: i32) -> (i32, i32, i32) {
    %c0_i32 = arith.constant 0 : i32
    %c0_i32_0 = arith.constant 0 : i32
    %c0_i32_1 = arith.constant 0 : i32
    return %arg0, %c0_i32, %c0_i32_0 : i32, i32, i32
  }
}

</mosaic_0001>

<llo_original>
// kernel: cross_attention_layer.1
$region0: #{cross_attention_layer.1}
  #allocation0 [shape = 'u32[]', space=smem, size = 0x4, offset = 0x4, fixed_abs, tag = 'smem constant byte address 0x4 - core index']
  #allocation1 [shape = 'u32[144,128]{1,0:T(1,128)}', space=vmem, size = 0x12000, scoped, tag = 'internal scratch']
  %s0 = inlined_call_operand.vmem [shape: f32[2,8,32], index: 0, kind: input, shape index: {}]
  %s1 = inlined_call_operand.vmem [shape: f32[2,8,32], index: 1, kind: input, shape index: {}]
  %s2 = inlined_call_operand.vmem [shape: f32[2,8,32], index: 2, kind: input, shape index: {}]
  %s3 = inlined_call_operand.vmem [shape: f32[4,32,8], index: 3, kind: input, shape index: {}]
  %s4 = inlined_call_operand.vmem [shape: f32[4,1,8], index: 4, kind: input, shape index: {}]
  %s5 = inlined_call_operand.vmem [shape: f32[4,32,8], index: 5, kind: input, shape index: {}]
  %s6 = inlined_call_operand.vmem [shape: f32[4,1,8], index: 6, kind: input, shape index: {}]
  %s7 = inlined_call_operand.vmem [shape: f32[4,32,8], index: 7, kind: input, shape index: {}]
  %s8 = inlined_call_operand.vmem [shape: f32[4,1,8], index: 8, kind: input, shape index: {}]
  %s9 = inlined_call_operand.vmem [shape: f32[4,8,32], index: 9, kind: input, shape index: {}]
  %s10 = inlined_call_operand.vmem [shape: f32[1,32], index: 10, kind: input, shape index: {}]
  %s11 = inlined_call_operand.hbm [shape: f32[2,8,32], index: 11, kind: output, shape index: {}]
  %s12 = sld [smem:[#allocation0]]
  $region77: #{cross_attention_layer.1} parent=0
    _
  %s14 = ssub.s32 1, %s12
  %s15 = scalar_select 0, %s14, %s12
  $region1: #{cross_attention_layer.1} parent=0
    #allocation2 [shape = 'u8[8192]{0}', space=vmem, size = 0x2000, scoped, tag = 'output window, operand 0']
    #allocation3 [shape = 's32[2]{0}', space=sflag, size = 0x8, scoped, tag = 'scoped memory for cross_attention_layer.1']
    %16 = vsyncpa [#allocation3], 0
    %s17 = scalar_lea.sflag [#allocation3], 1
    %18 = vsyncpa %s17, 0
    loop: start=0, step=1, limit=4
    $region2: #{cross_attention_layer.1} parent=1 // loop_pre_header
      _
    $region3: #{cross_attention_layer.1} parent=1 // loop_header
      %s20 = sphi 0, %s24
      %p21 = scmp.ge.s32.totalorder %s20, 4
      %s30 = sphi 0, %s32
      %s33 = sphi 0, %s30
      %s34 = sphi 0, %s33
      %s50 = sphi 0, %s34
      %s56 = sphi 0, %s58
      %s59 = sphi 0, %s56
      %s60 = sphi 0, %s59
      %s76 = sphi 0, %s60
      %s82 = sphi 0, %s84
      %s85 = sphi 0, %s82
      %s86 = sphi 0, %s85
      %s102 = sphi 0, %s86
      %s106 = sphi 0, %s106
      %s108 = sphi 0, %s106
      %s109 = sphi 0, %s108
      %s123 = sphi 0, %s109
      %s127 = sphi 0, %s127
      %s129 = sphi 0, %s127
      %s130 = sphi 0, %s129
      %s144 = sphi 0, %s130
      %s148 = sphi 0, %s148
      %s150 = sphi 0, %s148
      %s151 = sphi 0, %s150
      %s165 = sphi 0, %s151
      %s169 = sphi 0, %s169
      %s171 = sphi 0, %s169
      %s172 = sphi 0, %s171
      %s186 = sphi 0, %s172
      %s190 = sphi 0, %s190
      %s192 = sphi 0, %s190
      %s193 = sphi 0, %s192
      %s207 = sphi 0, %s193
      %s211 = sphi 0, %s211
      %s213 = sphi 0, %s211
      %s214 = sphi 0, %s213
      %s228 = sphi 0, %s214
      %s232 = sphi 0, %s232
      %s234 = sphi 0, %s232
      %s235 = sphi 0, %s234
      %s249 = sphi 0, %s235
      %s253 = sphi 0, %s253
      %s255 = sphi 0, %s253
      %s256 = sphi 0, %s255
      %s270 = sphi 0, %s256
      %s276 = sphi 0, %s278
      %s279 = sphi 0, %s276
      %s280 = sphi 0, %s279
      %s296 = sphi 0, %s280
    $region4: #{cross_attention_layer.1} parent=1 // loop_header_branch
      %23 = sbr.rel (%p21) target = $region8
    $region5: #{cross_attention_layer.1} parent=1 // loop_body
      %s25 = ssub.s32 %s20, 1
      %s26 = ssub.s32 %s20, 2
      %s27 = sadd.s32 %s20, 1
      %s28 = ssub.s32 %s20, %s27
      %p29 = scmp.eq.s32.totalorder %s28, 0
      %s31 = sadd.s32 %s30, 1
      %s32 = scalar_select %p29, %s30, %s31
      %p35 = pneg %p29
      %p36 = scmp.eq.s32.totalorder %s20, 1
      %p37 = por %p35, %p36
      %p38 = scmp.ne.s32.totalorder %s30, %s33
      %p39 = scmp.eq.s32.totalorder %s20, 0
      %p40 = por %p38, %p39
      %p41 = scmp.ne.s32.totalorder %s30, %s33
      %p42 = scmp.eq.s32.totalorder %s25, 1
      %p43 = por %p41, %p42
      %p44 = scmp.ne.s32.totalorder %s33, %s34
      %p45 = scmp.eq.s32.totalorder %s25, 0
      %p46 = por %p44, %p45
      %p47 = scmp.ne.s32.totalorder %s33, %s34
      %p48 = scmp.eq.s32.totalorder %s26, 1
      %p49 = por %p47, %p48
      %p51 = scmp.ne.s32.totalorder %s34, %s50
      %p52 = scmp.eq.s32.totalorder %s26, 0
      %p53 = por %p51, %p52
      %s54 = ssub.s32 %s20, %s27
      %p55 = scmp.eq.s32.totalorder %s54, 0
      %s57 = sadd.s32 %s56, 1
      %s58 = scalar_select %p55, %s56, %s57
      %p61 = pneg %p55
      %p62 = scmp.eq.s32.totalorder %s20, 1
      %p63 = por %p61, %p62
      %p64 = scmp.ne.s32.totalorder %s56, %s59
      %p65 = scmp.eq.s32.totalorder %s20, 0
      %p66 = por %p64, %p65
      %p67 = scmp.ne.s32.totalorder %s56, %s59
      %p68 = scmp.eq.s32.totalorder %s25, 1
      %p69 = por %p67, %p68
      %p70 = scmp.ne.s32.totalorder %s59, %s60
      %p71 = scmp.eq.s32.totalorder %s25, 0
      %p72 = por %p70, %p71
      %p73 = scmp.ne.s32.totalorder %s59, %s60
      %p74 = scmp.eq.s32.totalorder %s26, 1
      %p75 = por %p73, %p74
      %p77 = scmp.ne.s32.totalorder %s60, %s76
      %p78 = scmp.eq.s32.totalorder %s26, 0
      %p79 = por %p77, %p78
      %s80 = ssub.s32 %s20, %s27
      %p81 = scmp.eq.s32.totalorder %s80, 0
      %s83 = sadd.s32 %s82, 1
      %s84 = scalar_select %p81, %s82, %s83
      %p87 = pneg %p81
      %p88 = scmp.eq.s32.totalorder %s20, 1
      %p89 = por %p87, %p88
      %p90 = scmp.ne.s32.totalorder %s82, %s85
      %p91 = scmp.eq.s32.totalorder %s20, 0
      %p92 = por %p90, %p91
      %p93 = scmp.ne.s32.totalorder %s82, %s85
      %p94 = scmp.eq.s32.totalorder %s25, 1
      %p95 = por %p93, %p94
      %p96 = scmp.ne.s32.totalorder %s85, %s86
      %p97 = scmp.eq.s32.totalorder %s25, 0
      %p98 = por %p96, %p97
      %p99 = scmp.ne.s32.totalorder %s85, %s86
      %p100 = scmp.eq.s32.totalorder %s26, 1
      %p101 = por %p99, %p100
      %p103 = scmp.ne.s32.totalorder %s86, %s102
      %p104 = scmp.eq.s32.totalorder %s26, 0
      %p105 = por %p103, %p104
      %s107 = sadd.s32 %s106, 1
      %p110 = scmp.eq.s32.totalorder %s20, 1
      %p111 = scmp.ne.s32.totalorder %s106, %s108
      %p112 = scmp.eq.s32.totalorder %s20, 0
      %p113 = por %p111, %p112
      %p114 = scmp.ne.s32.totalorder %s106, %s108
      %p115 = scmp.eq.s32.totalorder %s25, 1
      %p116 = por %p114, %p115
      %p117 = scmp.ne.s32.totalorder %s108, %s109
      %p118 = scmp.eq.s32.totalorder %s25, 0
      %p119 = por %p117, %p118
      %p120 = scmp.ne.s32.totalorder %s108, %s109
      %p121 = scmp.eq.s32.totalorder %s26, 1
      %p122 = por %p120, %p121
      %p124 = scmp.ne.s32.totalorder %s109, %s123
      %p125 = scmp.eq.s32.totalorder %s26, 0
      %p126 = por %p124, %p125
      %s128 = sadd.s32 %s127, 1
      %p131 = scmp.eq.s32.totalorder %s20, 1
      %p132 = scmp.ne.s32.totalorder %s127, %s129
      %p133 = scmp.eq.s32.totalorder %s20, 0
      %p134 = por %p132, %p133
      %p135 = scmp.ne.s32.totalorder %s127, %s129
      %p136 = scmp.eq.s32.totalorder %s25, 1
      %p137 = por %p135, %p136
      %p138 = scmp.ne.s32.totalorder %s129, %s130
      %p139 = scmp.eq.s32.totalorder %s25, 0
      %p140 = por %p138, %p139
      %p141 = scmp.ne.s32.totalorder %s129, %s130
      %p142 = scmp.eq.s32.totalorder %s26, 1
      %p143 = por %p141, %p142
      %p145 = scmp.ne.s32.totalorder %s130, %s144
      %p146 = scmp.eq.s32.totalorder %s26, 0
      %p147 = por %p145, %p146
      %s149 = sadd.s32 %s148, 1
      %p152 = scmp.eq.s32.totalorder %s20, 1
      %p153 = scmp.ne.s32.totalorder %s148, %s150
      %p154 = scmp.eq.s32.totalorder %s20, 0
      %p155 = por %p153, %p154
      %p156 = scmp.ne.s32.totalorder %s148, %s150
      %p157 = scmp.eq.s32.totalorder %s25, 1
      %p158 = por %p156, %p157
      %p159 = scmp.ne.s32.totalorder %s150, %s151
      %p160 = scmp.eq.s32.totalorder %s25, 0
      %p161 = por %p159, %p160
      %p162 = scmp.ne.s32.totalorder %s150, %s151
      %p163 = scmp.eq.s32.totalorder %s26, 1
      %p164 = por %p162, %p163
      %p166 = scmp.ne.s32.totalorder %s151, %s165
      %p167 = scmp.eq.s32.totalorder %s26, 0
      %p168 = por %p166, %p167
      %s170 = sadd.s32 %s169, 1
      %p173 = scmp.eq.s32.totalorder %s20, 1
      %p174 = scmp.ne.s32.totalorder %s169, %s171
      %p175 = scmp.eq.s32.totalorder %s20, 0
      %p176 = por %p174, %p175
      %p177 = scmp.ne.s32.totalorder %s169, %s171
      %p178 = scmp.eq.s32.totalorder %s25, 1
      %p179 = por %p177, %p178
      %p180 = scmp.ne.s32.totalorder %s171, %s172
      %p181 = scmp.eq.s32.totalorder %s25, 0
      %p182 = por %p180, %p181
      %p183 = scmp.ne.s32.totalorder %s171, %s172
      %p184 = scmp.eq.s32.totalorder %s26, 1
      %p185 = por %p183, %p184
      %p187 = scmp.ne.s32.totalorder %s172, %s186
      %p188 = scmp.eq.s32.totalorder %s26, 0
      %p189 = por %p187, %p188
      %s191 = sadd.s32 %s190, 1
      %p194 = scmp.eq.s32.totalorder %s20, 1
      %p195 = scmp.ne.s32.totalorder %s190, %s192
      %p196 = scmp.eq.s32.totalorder %s20, 0
      %p197 = por %p195, %p196
      %p198 = scmp.ne.s32.totalorder %s190, %s192
      %p199 = scmp.eq.s32.totalorder %s25, 1
      %p200 = por %p198, %p199
      %p201 = scmp.ne.s32.totalorder %s192, %s193
      %p202 = scmp.eq.s32.totalorder %s25, 0
      %p203 = por %p201, %p202
      %p204 = scmp.ne.s32.totalorder %s192, %s193
      %p205 = scmp.eq.s32.totalorder %s26, 1
      %p206 = por %p204, %p205
      %p208 = scmp.ne.s32.totalorder %s193, %s207
      %p209 = scmp.eq.s32.totalorder %s26, 0
      %p210 = por %p208, %p209
      %s212 = sadd.s32 %s211, 1
      %p215 = scmp.eq.s32.totalorder %s20, 1
      %p216 = scmp.ne.s32.totalorder %s211, %s213
      %p217 = scmp.eq.s32.totalorder %s20, 0
      %p218 = por %p216, %p217
      %p219 = scmp.ne.s32.totalorder %s211, %s213
      %p220 = scmp.eq.s32.totalorder %s25, 1
      %p221 = por %p219, %p220
      %p222 = scmp.ne.s32.totalorder %s213, %s214
      %p223 = scmp.eq.s32.totalorder %s25, 0
      %p224 = por %p222, %p223
      %p225 = scmp.ne.s32.totalorder %s213, %s214
      %p226 = scmp.eq.s32.totalorder %s26, 1
      %p227 = por %p225, %p226
      %p229 = scmp.ne.s32.totalorder %s214, %s228
      %p230 = scmp.eq.s32.totalorder %s26, 0
      %p231 = por %p229, %p230
      %s233 = sadd.s32 %s232, 1
      %p236 = scmp.eq.s32.totalorder %s20, 1
      %p237 = scmp.ne.s32.totalorder %s232, %s234
      %p238 = scmp.eq.s32.totalorder %s20, 0
      %p239 = por %p237, %p238
      %p240 = scmp.ne.s32.totalorder %s232, %s234
      %p241 = scmp.eq.s32.totalorder %s25, 1
      %p242 = por %p240, %p241
      %p243 = scmp.ne.s32.totalorder %s234, %s235
      %p244 = scmp.eq.s32.totalorder %s25, 0
      %p245 = por %p243, %p244
      %p246 = scmp.ne.s32.totalorder %s234, %s235
      %p247 = scmp.eq.s32.totalorder %s26, 1
      %p248 = por %p246, %p247
      %p250 = scmp.ne.s32.totalorder %s235, %s249
      %p251 = scmp.eq.s32.totalorder %s26, 0
      %p252 = por %p250, %p251
      %s254 = sadd.s32 %s253, 1
      %p257 = scmp.eq.s32.totalorder %s20, 1
      %p258 = scmp.ne.s32.totalorder %s253, %s255
      %p259 = scmp.eq.s32.totalorder %s20, 0
      %p260 = por %p258, %p259
      %p261 = scmp.ne.s32.totalorder %s253, %s255
      %p262 = scmp.eq.s32.totalorder %s25, 1
      %p263 = por %p261, %p262
      %p264 = scmp.ne.s32.totalorder %s255, %s256
      %p265 = scmp.eq.s32.totalorder %s25, 0
      %p266 = por %p264, %p265
      %p267 = scmp.ne.s32.totalorder %s255, %s256
      %p268 = scmp.eq.s32.totalorder %s26, 1
      %p269 = por %p267, %p268
      %p271 = scmp.ne.s32.totalorder %s256, %s270
      %p272 = scmp.eq.s32.totalorder %s26, 0
      %p273 = por %p271, %p272
      %s274 = ssub.s32 %s20, %s27
      %p275 = scmp.eq.s32.totalorder %s274, 0
      %s277 = sadd.s32 %s276, 1
      %s278 = scalar_select %p275, %s276, %s277
      %p281 = pneg %p275
      %p282 = scmp.eq.s32.totalorder %s20, 1
      %p283 = por %p281, %p282
      %p284 = scmp.ne.s32.totalorder %s276, %s279
      %p285 = scmp.eq.s32.totalorder %s20, 0
      %p286 = por %p284, %p285
      %p287 = scmp.ne.s32.totalorder %s276, %s279
      %p288 = scmp.eq.s32.totalorder %s25, 1
      %p289 = por %p287, %p288
      %p290 = scmp.ne.s32.totalorder %s279, %s280
      %p291 = scmp.eq.s32.totalorder %s25, 0
      %p292 = por %p290, %p291
      %p293 = scmp.ne.s32.totalorder %s279, %s280
      %p294 = scmp.eq.s32.totalorder %s26, 1
      %p295 = por %p293, %p294
      %p297 = scmp.ne.s32.totalorder %s280, %s296
      %p298 = scmp.eq.s32.totalorder %s26, 0
      %p299 = por %p297, %p298
      %p300 = scmp.le.s32.totalorder 1, %s20
      %p301 = scmp.lt.s32.totalorder %s20, 3
      %p302 = pnand %p300, %p301
      %p303 = pneg %p302
      // Predicated region
      $region9: #{cross_attention_layer.1} parent=5 // pred_check
        _
      $region10: #{cross_attention_layer.1} parent=5 // pred_check_branch
        %305 = sbr.rel (%p302) target = $region12
      $region11: #{cross_attention_layer.1} parent=5 // pred_region
        %s306 = ssub.s32 %s20, 1
        // Predicated region
        $region13: #{cross_attention_layer.1} parent=11 // pred_check
          %p307 = pneg %p119
        $region14: #{cross_attention_layer.1} parent=11 // pred_check_branch
          %309 = sbr.rel (%p307) target = $region16
        $region15: #{cross_attention_layer.1} parent=11 // pred_region
          _
        $region16: #{cross_attention_layer.1} parent=11 // pred_fallthru
          _
        // Predicated region
        $region17: #{cross_attention_layer.1} parent=11 // pred_check
          %p310 = pneg %p140
        $region18: #{cross_attention_layer.1} parent=11 // pred_check_branch
          %312 = sbr.rel (%p310) target = $region20
        $region19: #{cross_attention_layer.1} parent=11 // pred_region
          _
        $region20: #{cross_attention_layer.1} parent=11 // pred_fallthru
          _
        // Predicated region
        $region21: #{cross_attention_layer.1} parent=11 // pred_check
          %p313 = pneg %p161
        $region22: #{cross_attention_layer.1} parent=11 // pred_check_branch
          %315 = sbr.rel (%p313) target = $region24
        $region23: #{cross_attention_layer.1} parent=11 // pred_region
          _
        $region24: #{cross_attention_layer.1} parent=11 // pred_fallthru
          _
        // Predicated region
        $region25: #{cross_attention_layer.1} parent=11 // pred_check
          %p316 = pneg %p182
        $region26: #{cross_attention_layer.1} parent=11 // pred_check_branch
          %318 = sbr.rel (%p316) target = $region28
        $region27: #{cross_attention_layer.1} parent=11 // pred_region
          _
        $region28: #{cross_attention_layer.1} parent=11 // pred_fallthru
          _
        // Predicated region
        $region29: #{cross_attention_layer.1} parent=11 // pred_check
          %p319 = pneg %p203
        $region30: #{cross_attention_layer.1} parent=11 // pred_check_branch
          %321 = sbr.rel (%p319) target = $region32
        $region31: #{cross_attention_layer.1} parent=11 // pred_region
          _
        $region32: #{cross_attention_layer.1} parent=11 // pred_fallthru
          _
        // Predicated region
        $region33: #{cross_attention_layer.1} parent=11 // pred_check
          %p322 = pneg %p224
        $region34: #{cross_attention_layer.1} parent=11 // pred_check_branch
          %324 = sbr.rel (%p322) target = $region36
        $region35: #{cross_attention_layer.1} parent=11 // pred_region
          _
        $region36: #{cross_attention_layer.1} parent=11 // pred_fallthru
          _
        // Predicated region
        $region37: #{cross_attention_layer.1} parent=11 // pred_check
          %p325 = pneg %p245
        $region38: #{cross_attention_layer.1} parent=11 // pred_check_branch
          %327 = sbr.rel (%p325) target = $region40
        $region39: #{cross_attention_layer.1} parent=11 // pred_region
          _
        $region40: #{cross_attention_layer.1} parent=11 // pred_fallthru
          _
        // Predicated region
        $region41: #{cross_attention_layer.1} parent=11 // pred_check
          %p328 = pneg %p266
        $region42: #{cross_attention_layer.1} parent=11 // pred_check_branch
          %330 = sbr.rel (%p328) target = $region44
        $region43: #{cross_attention_layer.1} parent=11 // pred_region
          _
        $region44: #{cross_attention_layer.1} parent=11 // pred_fallthru
          _
      $region12: #{cross_attention_layer.1} parent=5 // pred_fallthru
        _
      %p331 = scmp.lt.s32.totalorder %s20, 2
      // Predicated region
      $region45: #{cross_attention_layer.1} parent=5 // pred_check
        %p332 = pneg %p331
      $region46: #{cross_attention_layer.1} parent=5 // pred_check_branch
        %334 = sbr.rel (%p332) target = $region48
      $region47: #{cross_attention_layer.1} parent=5 // pred_region
        // Predicated region
        $region49: #{cross_attention_layer.1} parent=47 // pred_check
          %p335 = pneg %p40
        $region50: #{cross_attention_layer.1} parent=47 // pred_check_branch
          %337 = sbr.rel (%p335) target = $region52
        $region51: #{cross_attention_layer.1} parent=47 // pred_region
          %p338 = scmp.lt.s32.totalorder %s20, 1
          %s339 = scalar_select %p338, %s20, 1
          %s340 = smul.addr %s339, 8
          %s341 = scalar_lea.vmem %s0, %s340
        $region52: #{cross_attention_layer.1} parent=47 // pred_fallthru
          _
        // Predicated region
        $region53: #{cross_attention_layer.1} parent=47 // pred_check
          %p342 = pneg %p66
        $region54: #{cross_attention_layer.1} parent=47 // pred_check_branch
          %344 = sbr.rel (%p342) target = $region56
        $region55: #{cross_attention_layer.1} parent=47 // pred_region
          %p345 = scmp.lt.s32.totalorder %s20, 1
          %s346 = scalar_select %p345, %s20, 1
          %s347 = smul.addr %s346, 8
          %s348 = scalar_lea.vmem %s1, %s347
        $region56: #{cross_attention_layer.1} parent=47 // pred_fallthru
          _
        // Predicated region
        $region57: #{cross_attention_layer.1} parent=47 // pred_check
          %p349 = pneg %p92
        $region58: #{cross_attention_layer.1} parent=47 // pred_check_branch
          %351 = sbr.rel (%p349) target = $region60
        $region59: #{cross_attention_layer.1} parent=47 // pred_region
          %p352 = scmp.lt.s32.totalorder %s20, 1
          %s353 = scalar_select %p352, %s20, 1
          %s354 = smul.addr %s353, 8
          %s355 = scalar_lea.vmem %s2, %s354
        $region60: #{cross_attention_layer.1} parent=47 // pred_fallthru
          _
      $region48: #{cross_attention_layer.1} parent=5 // pred_fallthru
        _
      %p356 = scmp.le.s32.totalorder 1, %s20
      %p357 = scmp.lt.s32.totalorder %s20, 3
      %p358 = pnand %p356, %p357
      %p359 = pneg %p358
      // Predicated region
      $region61: #{cross_attention_layer.1} parent=5 // pred_check
        _
      $region62: #{cross_attention_layer.1} parent=5 // pred_check_branch
        %361 = sbr.rel (%p358) target = $region64
      $region63: #{cross_attention_layer.1} parent=5 // pred_region
        %s362 = ssub.s32 %s20, 1
        %p363 = scmp.lt.s32.totalorder %s25, 1
        %s364 = scalar_select %p363, %s25, 1
        %s365 = smul.addr %s364, 8
        %s366 = scalar_lea.vmem %s0, %s365
        %p367 = pneg %p46
        %p368 = pneg %p43
        %p369 = scmp.lt.s32.totalorder %s25, 1
        %s370 = scalar_select %p369, %s25, 1
        %s371 = smul.addr %s370, 8
        %s372 = scalar_lea.vmem %s1, %s371
        %p373 = pneg %p72
        %p374 = pneg %p69
        %p375 = scmp.lt.s32.totalorder %s25, 1
        %s376 = scalar_select %p375, %s25, 1
        %s377 = smul.addr %s376, 8
        %s378 = scalar_lea.vmem %s2, %s377
        %p379 = pneg %p98
        %p380 = pneg %p95
        %p381 = pneg %p119
        %p382 = pneg %p116
        %p383 = pneg %p140
        %p384 = pneg %p137
        %p385 = pneg %p161
        %p386 = pneg %p158
        %p387 = pneg %p182
        %p388 = pneg %p179
        %p389 = pneg %p203
        %p390 = pneg %p200
        %p391 = pneg %p224
        %p392 = pneg %p221
        %p393 = pneg %p245
        %p394 = pneg %p242
        %p395 = pneg %p266
        %p396 = pneg %p263
        %p397 = pneg %p292
        %p398 = pneg %p289
        %s399 = sand.u32 %s279, 1
        %s400 = scalar_lea.sflag [#allocation3], %s399
        %s401 = sand.u32 %s279, 1
        %s402 = smul.addr %s401, 8
        %s403 = scalar_lea.vmem [#allocation2], %s402
        %p404 = scmp.lt.s32.totalorder %s25, 1
        %s405 = scalar_select %p404, %s25, 1
        %s406 = smul.addr %s405, 8
        %s407 = scalar_lea.vmem %s0, %s406
        %p408 = scmp.lt.s32.totalorder %s25, 1
        %s409 = scalar_select %p408, %s25, 1
        %s410 = smul.addr %s409, 8
        %s411 = scalar_lea.vmem %s1, %s410
        %p412 = scmp.lt.s32.totalorder %s25, 1
        %s413 = scalar_select %p412, %s25, 1
        %s414 = smul.addr %s413, 8
        %s415 = scalar_lea.vmem %s2, %s414
        %v417 = vld [vmem:[%s407] sm:$0xff]
        %v418 = vpack.c.bf16 %v417, %v417
        %v419 = vld [vmem:[%s411] sm:$0xff]
        %v420 = vpack.c.bf16 %v419, %v419
        %v421 = vld [vmem:[%s415] sm:$0xff]
        %v422 = vpack.c.bf16 %v421, %v421
        %v423 = vld [vmem:[%s3] sm:$0xff]
        %v424 = vld [vmem:[%s3 + $0x8] sm:$0xff]
        %v425 = vld [vmem:[%s3 + $0x10] sm:$0xff]
        %v426 = vld [vmem:[%s3 + $0x18] sm:$0xff]
        %v427 = vld [vmem:[%s3 + $0x20] sm:$0xff]
        %v428 = vld [vmem:[%s3 + $0x28] sm:$0xff]
        %v429 = vld [vmem:[%s3 + $0x30] sm:$0xff]
        %v430 = vld [vmem:[%s3 + $0x38] sm:$0xff]
        %v431 = vld [vmem:[%s3 + $0x40] sm:$0xff]
        %v432 = vld [vmem:[%s3 + $0x48] sm:$0xff]
        %v433 = vld [vmem:[%s3 + $0x50] sm:$0xff]
        %v434 = vld [vmem:[%s3 + $0x58] sm:$0xff]
        %v435 = vld [vmem:[%s3 + $0x60] sm:$0xff]
        %v436 = vld [vmem:[%s3 + $0x68] sm:$0xff]
        %v437 = vld [vmem:[%s3 + $0x70] sm:$0xff]
        %v438 = vld [vmem:[%s3 + $0x78] sm:$0xff]
        %v439 = vpack.c.bf16 %v424, %v423
        %v440 = vpack.c.bf16 %v426, %v425
        %v441 = vpack.c.bf16 %v428, %v427
        %v442 = vpack.c.bf16 %v430, %v429
        %v443 = vpack.c.bf16 %v432, %v431
        %v444 = vpack.c.bf16 %v434, %v433
        %v445 = vpack.c.bf16 %v436, %v435
        %v446 = vpack.c.bf16 %v438, %v437
        %v447 = vld [vmem:[%s4] sm:$0x1]
        %v448 = vld [vmem:[%s4 + $0x1] sm:$0x1]
        %v449 = vld [vmem:[%s4 + $0x2] sm:$0x1]
        %v450 = vld [vmem:[%s4 + $0x3] sm:$0x1]
        %v455 = vlaneseq
        %v456 = vshrl.u32 %v455, 7
        %v457 = vsub.s32 0, %v456
        %v458 = vrot.slane %v447, %v457
        %v459 = vlaneseq
        %v460 = vshrl.u32 %v459, 7
        %v461 = vsub.s32 0, %v460
        %v462 = vrot.slane %v448, %v461
        %v463 = vlaneseq
        %v464 = vshrl.u32 %v463, 7
        %v465 = vsub.s32 0, %v464
        %v466 = vrot.slane %v449, %v465
        %v467 = vlaneseq
        %v468 = vshrl.u32 %v467, 7
        %v469 = vsub.s32 0, %v468
        %v470 = vrot.slane %v450, %v469
        %vm475 = vcmask 261120
        %v477 = vsel %vm475, %v418, 0
        %479 = vmatprep.subr.bf16.mxu0 0
        %480 = vmatpush1.bf16.msra.mxu0 %v439
        %481 = vmatprep.subr.bf16.mxu0 0
        %482 = vmatpush1.bf16.msra.mxu0 %v440
        %483 = vmatprep.subr.bf16.mxu0 0
        %484 = vmatpush1.bf16.msra.mxu0 0
        %485 = vmatprep.subr.bf16.mxu0 0
        %486 = vmatpush1.bf16.msra.mxu0 0
        %487 = vmatprep.subr.bf16.mxu0 0
        %488 = vmatpush1.bf16.msra.mxu0 0
        %489 = vmatprep.subr.bf16.mxu0 0
        %490 = vmatpush1.bf16.msra.mxu0 0
        %491 = vmatprep.subr.bf16.mxu0 0
        %492 = vmatpush1.bf16.msra.mxu0 0
        %493 = vmatprep.subr.bf16.mxu0 0
        %494 = vmatpush1.bf16.msra.mxu0 0
        %495 = vmatprep.subr.bf16.mxu0 0
        %496 = vmatpush1.bf16.msra.mxu0 0
        %497 = vmatprep.subr.bf16.mxu0 0
        %498 = vmatpush1.bf16.msra.mxu0 0
        %499 = vmatprep.subr.bf16.mxu0 0
        %500 = vmatpush1.bf16.msra.mxu0 0
        %501 = vmatprep.subr.bf16.mxu0 0
        %502 = vmatpush1.bf16.msra.mxu0 0
        %503 = vmatprep.subr.bf16.mxu0 0
        %504 = vmatpush1.bf16.msra.mxu0 0
        %505 = vmatprep.subr.bf16.mxu0 0
        %506 = vmatpush1.bf16.msra.mxu0 0
        %507 = vmatprep.subr.bf16.mxu0 0
        %508 = vmatpush1.bf16.msra.mxu0 0
        %509 = vmatprep.subr.bf16.mxu0 0
        %510 = vmatpush1.bf16.msra.mxu0 0
        %511 = vmatprep.mubr.bf16.mxu0 0
        %512 = vmatmul.mubr.bf16.gmra.mrb[0].mxu0 %v477
        %v513 = vpop.f32.mrb[0].mxu0
        %v514 = vadd.f32 %v458, %v513
        %v515 = vpop.f32.mrb[0].mxu0
        %v516 = vpop.f32.mrb[0].mxu0
        %v517 = vpop.f32.mrb[0].mxu0
        %518 = vdwg.mxu0
        %519 = vmatprep.subr.bf16.mxu0 0
        %520 = vmatpush1.bf16.msra.mxu0 %v441
        %521 = vmatprep.subr.bf16.mxu0 0
        %522 = vmatpush1.bf16.msra.mxu0 %v442
        %523 = vmatprep.subr.bf16.mxu0 0
        %524 = vmatpush1.bf16.msra.mxu0 0
        %525 = vmatprep.subr.bf16.mxu0 0
        %526 = vmatpush1.bf16.msra.mxu0 0
        %527 = vmatprep.subr.bf16.mxu0 0
        %528 = vmatpush1.bf16.msra.mxu0 0
        %529 = vmatprep.subr.bf16.mxu0 0
        %530 = vmatpush1.bf16.msra.mxu0 0
        %531 = vmatprep.subr.bf16.mxu0 0
        %532 = vmatpush1.bf16.msra.mxu0 0
        %533 = vmatprep.subr.bf16.mxu0 0
        %534 = vmatpush1.bf16.msra.mxu0 0
        %535 = vmatprep.subr.bf16.mxu0 0
        %536 = vmatpush1.bf16.msra.mxu0 0
        %537 = vmatprep.subr.bf16.mxu0 0
        %538 = vmatpush1.bf16.msra.mxu0 0
        %539 = vmatprep.subr.bf16.mxu0 0
        %540 = vmatpush1.bf16.msra.mxu0 0
        %541 = vmatprep.subr.bf16.mxu0 0
        %542 = vmatpush1.bf16.msra.mxu0 0
        %543 = vmatprep.subr.bf16.mxu0 0
        %544 = vmatpush1.bf16.msra.mxu0 0
        %545 = vmatprep.subr.bf16.mxu0 0
        %546 = vmatpush1.bf16.msra.mxu0 0
        %547 = vmatprep.subr.bf16.mxu0 0
        %548 = vmatpush1.bf16.msra.mxu0 0
        %549 = vmatprep.subr.bf16.mxu0 0
        %550 = vmatpush1.bf16.msra.mxu0 0
        %551 = vmatprep.mubr.bf16.mxu0 0
        %552 = vmatmul.mubr.bf16.gmra.mrb[0].mxu0 %v477
        %v553 = vpop.f32.mrb[0].mxu0
        %v554 = vadd.f32 %v462, %v553
        %v555 = vpop.f32.mrb[0].mxu0
        %v556 = vpop.f32.mrb[0].mxu0
        %v557 = vpop.f32.mrb[0].mxu0
        %558 = vdwg.mxu0
        %559 = vmatprep.subr.bf16.mxu0 0
        %560 = vmatpush1.bf16.msra.mxu0 %v443
        %561 = vmatprep.subr.bf16.mxu0 0
        %562 = vmatpush1.bf16.msra.mxu0 %v444
        %563 = vmatprep.subr.bf16.mxu0 0
        %564 = vmatpush1.bf16.msra.mxu0 0
        %565 = vmatprep.subr.bf16.mxu0 0
        %566 = vmatpush1.bf16.msra.mxu0 0
        %567 = vmatprep.subr.bf16.mxu0 0
        %568 = vmatpush1.bf16.msra.mxu0 0
        %569 = vmatprep.subr.bf16.mxu0 0
        %570 = vmatpush1.bf16.msra.mxu0 0
        %571 = vmatprep.subr.bf16.mxu0 0
        %572 = vmatpush1.bf16.msra.mxu0 0
        %573 = vmatprep.subr.bf16.mxu0 0
        %574 = vmatpush1.bf16.msra.mxu0 0
        %575 = vmatprep.subr.bf16.mxu0 0
        %576 = vmatpush1.bf16.msra.mxu0 0
        %577 = vmatprep.subr.bf16.mxu0 0
        %578 = vmatpush1.bf16.msra.mxu0 0
        %579 = vmatprep.subr.bf16.mxu0 0
        %580 = vmatpush1.bf16.msra.mxu0 0
        %581 = vmatprep.subr.bf16.mxu0 0
        %582 = vmatpush1.bf16.msra.mxu0 0
        %583 = vmatprep.subr.bf16.mxu0 0
        %584 = vmatpush1.bf16.msra.mxu0 0
        %585 = vmatprep.subr.bf16.mxu0 0
        %586 = vmatpush1.bf16.msra.mxu0 0
        %587 = vmatprep.subr.bf16.mxu0 0
        %588 = vmatpush1.bf16.msra.mxu0 0
        %589 = vmatprep.subr.bf16.mxu0 0
        %590 = vmatpush1.bf16.msra.mxu0 0
        %591 = vmatprep.mubr.bf16.mxu0 0
        %592 = vmatmul.mubr.bf16.gmra.mrb[0].mxu0 %v477
        %v593 = vpop.f32.mrb[0].mxu0
        %v594 = vadd.f32 %v466, %v593
        %v595 = vpop.f32.mrb[0].mxu0
        %v596 = vpop.f32.mrb[0].mxu0
        %v597 = vpop.f32.mrb[0].mxu0
        %598 = vdwg.mxu0
        %599 = vmatprep.subr.bf16.mxu0 0
        %600 = vmatpush1.bf16.msra.mxu0 %v445
        %601 = vmatprep.subr.bf16.mxu0 0
        %602 = vmatpush1.bf16.msra.mxu0 %v446
        %603 = vmatprep.subr.bf16.mxu0 0
        %604 = vmatpush1.bf16.msra.mxu0 0
        %605 = vmatprep.subr.bf16.mxu0 0
        %606 = vmatpush1.bf16.msra.mxu0 0
        %607 = vmatprep.subr.bf16.mxu0 0
        %608 = vmatpush1.bf16.msra.mxu0 0
        %609 = vmatprep.subr.bf16.mxu0 0
        %610 = vmatpush1.bf16.msra.mxu0 0
        %611 = vmatprep.subr.bf16.mxu0 0
        %612 = vmatpush1.bf16.msra.mxu0 0
        %613 = vmatprep.subr.bf16.mxu0 0
        %614 = vmatpush1.bf16.msra.mxu0 0
        %615 = vmatprep.subr.bf16.mxu0 0
        %616 = vmatpush1.bf16.msra.mxu0 0
        %617 = vmatprep.subr.bf16.mxu0 0
        %618 = vmatpush1.bf16.msra.mxu0 0
        %619 = vmatprep.subr.bf16.mxu0 0
        %620 = vmatpush1.bf16.msra.mxu0 0
        %621 = vmatprep.subr.bf16.mxu0 0
        %622 = vmatpush1.bf16.msra.mxu0 0
        %623 = vmatprep.subr.bf16.mxu0 0
        %624 = vmatpush1.bf16.msra.mxu0 0
        %625 = vmatprep.subr.bf16.mxu0 0
        %626 = vmatpush1.bf16.msra.mxu0 0
        %627 = vmatprep.subr.bf16.mxu0 0
        %628 = vmatpush1.bf16.msra.mxu0 0
        %629 = vmatprep.subr.bf16.mxu0 0
        %630 = vmatpush1.bf16.msra.mxu0 0
        %631 = vmatprep.mubr.bf16.mxu0 0
        %632 = vmatmul.mubr.bf16.gmra.mrb[0].mxu0 %v477
        %v633 = vpop.f32.mrb[0].mxu0
        %v634 = vadd.f32 %v470, %v633
        %v635 = vpop.f32.mrb[0].mxu0
        %v636 = vpop.f32.mrb[0].mxu0
        %v637 = vpop.f32.mrb[0].mxu0
        %638 = vdwg.mxu0
        %v639 = vld [vmem:[%s5] sm:$0xff]
        %v640 = vld [vmem:[%s5 + $0x8] sm:$0xff]
        %v641 = vld [vmem:[%s5 + $0x10] sm:$0xff]
        %v642 = vld [vmem:[%s5 + $0x18] sm:$0xff]
        %v643 = vld [vmem:[%s5 + $0x20] sm:$0xff]
        %v644 = vld [vmem:[%s5 + $0x28] sm:$0xff]
        %v645 = vld [vmem:[%s5 + $0x30] sm:$0xff]
        %v646 = vld [vmem:[%s5 + $0x38] sm:$0xff]
        %v647 = vld [vmem:[%s5 + $0x40] sm:$0xff]
        %v648 = vld [vmem:[%s5 + $0x48] sm:$0xff]
        %v649 = vld [vmem:[%s5 + $0x50] sm:$0xff]
        %v650 = vld [vmem:[%s5 + $0x58] sm:$0xff]
        %v651 = vld [vmem:[%s5 + $0x60] sm:$0xff]
        %v652 = vld [vmem:[%s5 + $0x68] sm:$0xff]
        %v653 = vld [vmem:[%s5 + $0x70] sm:$0xff]
        %v654 = vld [vmem:[%s5 + $0x78] sm:$0xff]
        %v655 = vpack.c.bf16 %v640, %v639
        %v656 = vpack.c.bf16 %v642, %v641
        %v657 = vpack.c.bf16 %v644, %v643
        %v658 = vpack.c.bf16 %v646, %v645
        %v659 = vpack.c.bf16 %v648, %v647
        %v660 = vpack.c.bf16 %v650, %v649
        %v661 = vpack.c.bf16 %v652, %v651
        %v662 = vpack.c.bf16 %v654, %v653
        %v663 = vld [vmem:[%s6] sm:$0x1]
        %v664 = vld [vmem:[%s6 + $0x1] sm:$0x1]
        %v665 = vld [vmem:[%s6 + $0x2] sm:$0x1]
        %v666 = vld [vmem:[%s6 + $0x3] sm:$0x1]
        %v671 = vlaneseq
        %v672 = vshrl.u32 %v671, 7
        %v673 = vsub.s32 0, %v672
        %v674 = vrot.slane %v663, %v673
        %v675 = vlaneseq
        %v676 = vshrl.u32 %v675, 7
        %v677 = vsub.s32 0, %v676
        %v678 = vrot.slane %v664, %v677
        %v679 = vlaneseq
        %v680 = vshrl.u32 %v679, 7
        %v681 = vsub.s32 0, %v680
        %v682 = vrot.slane %v665, %v681
        %v683 = vlaneseq
        %v684 = vshrl.u32 %v683, 7
        %v685 = vsub.s32 0, %v684
        %v686 = vrot.slane %v666, %v685
        %v692 = vsel %vm475, %v420, 0
        %694 = vmatprep.subr.bf16.mxu0 0
        %695 = vmatpush1.bf16.msra.mxu0 %v655
        %696 = vmatprep.subr.bf16.mxu0 0
        %697 = vmatpush1.bf16.msra.mxu0 %v656
        %698 = vmatprep.subr.bf16.mxu0 0
        %699 = vmatpush1.bf16.msra.mxu0 0
        %700 = vmatprep.subr.bf16.mxu0 0
        %701 = vmatpush1.bf16.msra.mxu0 0
        %702 = vmatprep.subr.bf16.mxu0 0
        %703 = vmatpush1.bf16.msra.mxu0 0
        %704 = vmatprep.subr.bf16.mxu0 0
        %705 = vmatpush1.bf16.msra.mxu0 0
        %706 = vmatprep.subr.bf16.mxu0 0
        %707 = vmatpush1.bf16.msra.mxu0 0
        %708 = vmatprep.subr.bf16.mxu0 0
        %709 = vmatpush1.bf16.msra.mxu0 0
        %710 = vmatprep.subr.bf16.mxu0 0
        %711 = vmatpush1.bf16.msra.mxu0 0
        %712 = vmatprep.subr.bf16.mxu0 0
        %713 = vmatpush1.bf16.msra.mxu0 0
        %714 = vmatprep.subr.bf16.mxu0 0
        %715 = vmatpush1.bf16.msra.mxu0 0
        %716 = vmatprep.subr.bf16.mxu0 0
        %717 = vmatpush1.bf16.msra.mxu0 0
        %718 = vmatprep.subr.bf16.mxu0 0
        %719 = vmatpush1.bf16.msra.mxu0 0
        %720 = vmatprep.subr.bf16.mxu0 0
        %721 = vmatpush1.bf16.msra.mxu0 0
        %722 = vmatprep.subr.bf16.mxu0 0
        %723 = vmatpush1.bf16.msra.mxu0 0
        %724 = vmatprep.subr.bf16.mxu0 0
        %725 = vmatpush1.bf16.msra.mxu0 0
        %726 = vmatprep.mubr.bf16.mxu0 0
        %727 = vmatmul.mubr.bf16.gmra.mrb[0].mxu0 %v692
        %v728 = vpop.f32.mrb[0].mxu0
        %v729 = vadd.f32 %v674, %v728
        %v730 = vpop.f32.mrb[0].mxu0
        %v731 = vpop.f32.mrb[0].mxu0
        %v732 = vpop.f32.mrb[0].mxu0
        %733 = vdwg.mxu0
        %734 = vmatprep.subr.bf16.mxu0 0
        %735 = vmatpush1.bf16.msra.mxu0 %v657
        %736 = vmatprep.subr.bf16.mxu0 0
        %737 = vmatpush1.bf16.msra.mxu0 %v658
        %738 = vmatprep.subr.bf16.mxu0 0
        %739 = vmatpush1.bf16.msra.mxu0 0
        %740 = vmatprep.subr.bf16.mxu0 0
        %741 = vmatpush1.bf16.msra.mxu0 0
        %742 = vmatprep.subr.bf16.mxu0 0
        %743 = vmatpush1.bf16.msra.mxu0 0
        %744 = vmatprep.subr.bf16.mxu0 0
        %745 = vmatpush1.bf16.msra.mxu0 0
        %746 = vmatprep.subr.bf16.mxu0 0
        %747 = vmatpush1.bf16.msra.mxu0 0
        %748 = vmatprep.subr.bf16.mxu0 0
        %749 = vmatpush1.bf16.msra.mxu0 0
        %750 = vmatprep.subr.bf16.mxu0 0
        %751 = vmatpush1.bf16.msra.mxu0 0
        %752 = vmatprep.subr.bf16.mxu0 0
        %753 = vmatpush1.bf16.msra.mxu0 0
        %754 = vmatprep.subr.bf16.mxu0 0
        %755 = vmatpush1.bf16.msra.mxu0 0
        %756 = vmatprep.subr.bf16.mxu0 0
        %757 = vmatpush1.bf16.msra.mxu0 0
        %758 = vmatprep.subr.bf16.mxu0 0
        %759 = vmatpush1.bf16.msra.mxu0 0
        %760 = vmatprep.subr.bf16.mxu0 0
        %761 = vmatpush1.bf16.msra.mxu0 0
        %762 = vmatprep.subr.bf16.mxu0 0
        %763 = vmatpush1.bf16.msra.mxu0 0
        %764 = vmatprep.subr.bf16.mxu0 0
        %765 = vmatpush1.bf16.msra.mxu0 0
        %766 = vmatprep.mubr.bf16.mxu0 0
        %767 = vmatmul.mubr.bf16.gmra.mrb[0].mxu0 %v692
        %v768 = vpop.f32.mrb[0].mxu0
        %v769 = vadd.f32 %v678, %v768
        %v770 = vpop.f32.mrb[0].mxu0
        %v771 = vpop.f32.mrb[0].mxu0
        %v772 = vpop.f32.mrb[0].mxu0
        %773 = vdwg.mxu0
        %774 = vmatprep.subr.bf16.mxu0 0
        %775 = vmatpush1.bf16.msra.mxu0 %v659
        %776 = vmatprep.subr.bf16.mxu0 0
        %777 = vmatpush1.bf16.msra.mxu0 %v660
        %778 = vmatprep.subr.bf16.mxu0 0
        %779 = vmatpush1.bf16.msra.mxu0 0
        %780 = vmatprep.subr.bf16.mxu0 0
        %781 = vmatpush1.bf16.msra.mxu0 0
        %782 = vmatprep.subr.bf16.mxu0 0
        %783 = vmatpush1.bf16.msra.mxu0 0
        %784 = vmatprep.subr.bf16.mxu0 0
        %785 = vmatpush1.bf16.msra.mxu0 0
        %786 = vmatprep.subr.bf16.mxu0 0
        %787 = vmatpush1.bf16.msra.mxu0 0
        %788 = vmatprep.subr.bf16.mxu0 0
        %789 = vmatpush1.bf16.msra.mxu0 0
        %790 = vmatprep.subr.bf16.mxu0 0
        %791 = vmatpush1.bf16.msra.mxu0 0
        %792 = vmatprep.subr.bf16.mxu0 0
        %793 = vmatpush1.bf16.msra.mxu0 0
        %794 = vmatprep.subr.bf16.mxu0 0
        %795 = vmatpush1.bf16.msra.mxu0 0
        %796 = vmatprep.subr.bf16.mxu0 0
        %797 = vmatpush1.bf16.msra.mxu0 0
        %798 = vmatprep.subr.bf16.mxu0 0
        %799 = vmatpush1.bf16.msra.mxu0 0
        %800 = vmatprep.subr.bf16.mxu0 0
        %801 = vmatpush1.bf16.msra.mxu0 0
        %802 = vmatprep.subr.bf16.mxu0 0
        %803 = vmatpush1.bf16.msra.mxu0 0
        %804 = vmatprep.subr.bf16.mxu0 0
        %805 = vmatpush1.bf16.msra.mxu0 0
        %806 = vmatprep.mubr.bf16.mxu0 0
        %807 = vmatmul.mubr.bf16.gmra.mrb[0].mxu0 %v692
        %v808 = vpop.f32.mrb[0].mxu0
        %v809 = vadd.f32 %v682, %v808
        %v810 = vpop.f32.mrb[0].mxu0
        %v811 = vpop.f32.mrb[0].mxu0
        %v812 = vpop.f32.mrb[0].mxu0
        %813 = vdwg.mxu0
        %814 = vmatprep.subr.bf16.mxu0 0
        %815 = vmatpush1.bf16.msra.mxu0 %v661
        %816 = vmatprep.subr.bf16.mxu0 0
        %817 = vmatpush1.bf16.msra.mxu0 %v662
        %818 = vmatprep.subr.bf16.mxu0 0
        %819 = vmatpush1.bf16.msra.mxu0 0
        %820 = vmatprep.subr.bf16.mxu0 0
        %821 = vmatpush1.bf16.msra.mxu0 0
        %822 = vmatprep.subr.bf16.mxu0 0
        %823 = vmatpush1.bf16.msra.mxu0 0
        %824 = vmatprep.subr.bf16.mxu0 0
        %825 = vmatpush1.bf16.msra.mxu0 0
        %826 = vmatprep.subr.bf16.mxu0 0
        %827 = vmatpush1.bf16.msra.mxu0 0
        %828 = vmatprep.subr.bf16.mxu0 0
        %829 = vmatpush1.bf16.msra.mxu0 0
        %830 = vmatprep.subr.bf16.mxu0 0
        %831 = vmatpush1.bf16.msra.mxu0 0
        %832 = vmatprep.subr.bf16.mxu0 0
        %833 = vmatpush1.bf16.msra.mxu0 0
        %834 = vmatprep.subr.bf16.mxu0 0
        %835 = vmatpush1.bf16.msra.mxu0 0
        %836 = vmatprep.subr.bf16.mxu0 0
        %837 = vmatpush1.bf16.msra.mxu0 0
        %838 = vmatprep.subr.bf16.mxu0 0
        %839 = vmatpush1.bf16.msra.mxu0 0
        %840 = vmatprep.subr.bf16.mxu0 0
        %841 = vmatpush1.bf16.msra.mxu0 0
        %842 = vmatprep.subr.bf16.mxu0 0
        %843 = vmatpush1.bf16.msra.mxu0 0
        %844 = vmatprep.subr.bf16.mxu0 0
        %845 = vmatpush1.bf16.msra.mxu0 0
        %846 = vmatprep.mubr.bf16.mxu0 0
        %847 = vmatmul.mubr.bf16.gmra.mrb[0].mxu0 %v692
        %v848 = vpop.f32.mrb[0].mxu0
        %v849 = vadd.f32 %v686, %v848
        %v850 = vpop.f32.mrb[0].mxu0
        %v851 = vpop.f32.mrb[0].mxu0
        %v852 = vpop.f32.mrb[0].mxu0
        %853 = vdwg.mxu0
        %v854 = vld [vmem:[%s7] sm:$0xff]
        %v855 = vld [vmem:[%s7 + $0x8] sm:$0xff]
        %v856 = vld [vmem:[%s7 + $0x10] sm:$0xff]
        %v857 = vld [vmem:[%s7 + $0x18] sm:$0xff]
        %v858 = vld [vmem:[%s7 + $0x20] sm:$0xff]
        %v859 = vld [vmem:[%s7 + $0x28] sm:$0xff]
        %v860 = vld [vmem:[%s7 + $0x30] sm:$0xff]
        %v861 = vld [vmem:[%s7 + $0x38] sm:$0xff]
        %v862 = vld [vmem:[%s7 + $0x40] sm:$0xff]
        %v863 = vld [vmem:[%s7 + $0x48] sm:$0xff]
        %v864 = vld [vmem:[%s7 + $0x50] sm:$0xff]
        %v865 = vld [vmem:[%s7 + $0x58] sm:$0xff]
        %v866 = vld [vmem:[%s7 + $0x60] sm:$0xff]
        %v867 = vld [vmem:[%s7 + $0x68] sm:$0xff]
        %v868 = vld [vmem:[%s7 + $0x70] sm:$0xff]
        %v869 = vld [vmem:[%s7 + $0x78] sm:$0xff]
        %v870 = vpack.c.bf16 %v855, %v854
        %v871 = vpack.c.bf16 %v857, %v856
        %v872 = vpack.c.bf16 %v859, %v858
        %v873 = vpack.c.bf16 %v861, %v860
        %v874 = vpack.c.bf16 %v863, %v862
        %v875 = vpack.c.bf16 %v865, %v864
        %v876 = vpack.c.bf16 %v867, %v866
        %v877 = vpack.c.bf16 %v869, %v868
        %v878 = vld [vmem:[%s8] sm:$0x1]
        %v879 = vld [vmem:[%s8 + $0x1] sm:$0x1]
        %v880 = vld [vmem:[%s8 + $0x2] sm:$0x1]
        %v881 = vld [vmem:[%s8 + $0x3] sm:$0x1]
        %v886 = vlaneseq
        %v887 = vshrl.u32 %v886, 7
        %v888 = vsub.s32 0, %v887
        %v889 = vrot.slane %v878, %v888
        %v890 = vlaneseq
        %v891 = vshrl.u32 %v890, 7
        %v892 = vsub.s32 0, %v891
        %v893 = vrot.slane %v879, %v892
        %v894 = vlaneseq
        %v895 = vshrl.u32 %v894, 7
        %v896 = vsub.s32 0, %v895
        %v897 = vrot.slane %v880, %v896
        %v898 = vlaneseq
        %v899 = vshrl.u32 %v898, 7
        %v900 = vsub.s32 0, %v899
        %v901 = vrot.slane %v881, %v900
        %v907 = vsel %vm475, %v422, 0
        %909 = vmatprep.subr.bf16.mxu0 0
        %910 = vmatpush1.bf16.msra.mxu0 %v870
        %911 = vmatprep.subr.bf16.mxu0 0
        %912 = vmatpush1.bf16.msra.mxu0 %v871
        %913 = vmatprep.subr.bf16.mxu0 0
        %914 = vmatpush1.bf16.msra.mxu0 0
        %915 = vmatprep.subr.bf16.mxu0 0
        %916 = vmatpush1.bf16.msra.mxu0 0
        %917 = vmatprep.subr.bf16.mxu0 0
        %918 = vmatpush1.bf16.msra.mxu0 0
        %919 = vmatprep.subr.bf16.mxu0 0
        %920 = vmatpush1.bf16.msra.mxu0 0
        %921 = vmatprep.subr.bf16.mxu0 0
        %922 = vmatpush1.bf16.msra.mxu0 0
        %923 = vmatprep.subr.bf16.mxu0 0
        %924 = vmatpush1.bf16.msra.mxu0 0
        %925 = vmatprep.subr.bf16.mxu0 0
        %926 = vmatpush1.bf16.msra.mxu0 0
        %927 = vmatprep.subr.bf16.mxu0 0
        %928 = vmatpush1.bf16.msra.mxu0 0
        %929 = vmatprep.subr.bf16.mxu0 0
        %930 = vmatpush1.bf16.msra.mxu0 0
        %931 = vmatprep.subr.bf16.mxu0 0
        %932 = vmatpush1.bf16.msra.mxu0 0
        %933 = vmatprep.subr.bf16.mxu0 0
        %934 = vmatpush1.bf16.msra.mxu0 0
        %935 = vmatprep.subr.bf16.mxu0 0
        %936 = vmatpush1.bf16.msra.mxu0 0
        %937 = vmatprep.subr.bf16.mxu0 0
        %938 = vmatpush1.bf16.msra.mxu0 0
        %939 = vmatprep.subr.bf16.mxu0 0
        %940 = vmatpush1.bf16.msra.mxu0 0
        %941 = vmatprep.mubr.bf16.mxu0 0
        %942 = vmatmul.mubr.bf16.gmra.mrb[0].mxu0 %v907
        %v943 = vpop.f32.mrb[0].mxu0
        %v944 = vadd.f32 %v889, %v943
        %v945 = vpop.f32.mrb[0].mxu0
        %v946 = vpop.f32.mrb[0].mxu0
        %v947 = vpop.f32.mrb[0].mxu0
        %948 = vdwg.mxu0
        %949 = vmatprep.subr.bf16.mxu0 0
        %950 = vmatpush1.bf16.msra.mxu0 %v872
        %951 = vmatprep.subr.bf16.mxu0 0
        %952 = vmatpush1.bf16.msra.mxu0 %v873
        %953 = vmatprep.subr.bf16.mxu0 0
        %954 = vmatpush1.bf16.msra.mxu0 0
        %955 = vmatprep.subr.bf16.mxu0 0
        %956 = vmatpush1.bf16.msra.mxu0 0
        %957 = vmatprep.subr.bf16.mxu0 0
        %958 = vmatpush1.bf16.msra.mxu0 0
        %959 = vmatprep.subr.bf16.mxu0 0
        %960 = vmatpush1.bf16.msra.mxu0 0
        %961 = vmatprep.subr.bf16.mxu0 0
        %962 = vmatpush1.bf16.msra.mxu0 0
        %963 = vmatprep.subr.bf16.mxu0 0
        %964 = vmatpush1.bf16.msra.mxu0 0
        %965 = vmatprep.subr.bf16.mxu0 0
        %966 = vmatpush1.bf16.msra.mxu0 0
        %967 = vmatprep.subr.bf16.mxu0 0
        %968 = vmatpush1.bf16.msra.mxu0 0
        %969 = vmatprep.subr.bf16.mxu0 0
        %970 = vmatpush1.bf16.msra.mxu0 0
        %971 = vmatprep.subr.bf16.mxu0 0
        %972 = vmatpush1.bf16.msra.mxu0 0
        %973 = vmatprep.subr.bf16.mxu0 0
        %974 = vmatpush1.bf16.msra.mxu0 0
        %975 = vmatprep.subr.bf16.mxu0 0
        %976 = vmatpush1.bf16.msra.mxu0 0
        %977 = vmatprep.subr.bf16.mxu0 0
        %978 = vmatpush1.bf16.msra.mxu0 0
        %979 = vmatprep.subr.bf16.mxu0 0
        %980 = vmatpush1.bf16.msra.mxu0 0
        %981 = vmatprep.mubr.bf16.mxu0 0
        %982 = vmatmul.mubr.bf16.gmra.mrb[0].mxu0 %v907
        %v983 = vpop.f32.mrb[0].mxu0
        %v984 = vadd.f32 %v893, %v983
        %v985 = vpop.f32.mrb[0].mxu0
        %v986 = vpop.f32.mrb[0].mxu0
        %v987 = vpop.f32.mrb[0].mxu0
        %988 = vdwg.mxu0
        %989 = vmatprep.subr.bf16.mxu0 0
        %990 = vmatpush1.bf16.msra.mxu0 %v874
        %991 = vmatprep.subr.bf16.mxu0 0
        %992 = vmatpush1.bf16.msra.mxu0 %v875
        %993 = vmatprep.subr.bf16.mxu0 0
        %994 = vmatpush1.bf16.msra.mxu0 0
        %995 = vmatprep.subr.bf16.mxu0 0
        %996 = vmatpush1.bf16.msra.mxu0 0
        %997 = vmatprep.subr.bf16.mxu0 0
        %998 = vmatpush1.bf16.msra.mxu0 0
        %999 = vmatprep.subr.bf16.mxu0 0
        %1000 = vmatpush1.bf16.msra.mxu0 0
        %1001 = vmatprep.subr.bf16.mxu0 0
        %1002 = vmatpush1.bf16.msra.mxu0 0
        %1003 = vmatprep.subr.bf16.mxu0 0
        %1004 = vmatpush1.bf16.msra.mxu0 0
        %1005 = vmatprep.subr.bf16.mxu0 0
        %1006 = vmatpush1.bf16.msra.mxu0 0
        %1007 = vmatprep.subr.bf16.mxu0 0
        %1008 = vmatpush1.bf16.msra.mxu0 0
        %1009 = vmatprep.subr.bf16.mxu0 0
        %1010 = vmatpush1.bf16.msra.mxu0 0
        %1011 = vmatprep.subr.bf16.mxu0 0
        %1012 = vmatpush1.bf16.msra.mxu0 0
        %1013 = vmatprep.subr.bf16.mxu0 0
        %1014 = vmatpush1.bf16.msra.mxu0 0
        %1015 = vmatprep.subr.bf16.mxu0 0
        %1016 = vmatpush1.bf16.msra.mxu0 0
        %1017 = vmatprep.subr.bf16.mxu0 0
        %1018 = vmatpush1.bf16.msra.mxu0 0
        %1019 = vmatprep.subr.bf16.mxu0 0
        %1020 = vmatpush1.bf16.msra.mxu0 0
        %1021 = vmatprep.mubr.bf16.mxu0 0
        %1022 = vmatmul.mubr.bf16.gmra.mrb[0].mxu0 %v907
        %v1023 = vpop.f32.mrb[0].mxu0
        %v1024 = vadd.f32 %v897, %v1023
        %v1025 = vpop.f32.mrb[0].mxu0
        %v1026 = vpop.f32.mrb[0].mxu0
        %v1027 = vpop.f32.mrb[0].mxu0
        %1028 = vdwg.mxu0
        %1029 = vmatprep.subr.bf16.mxu0 0
        %1030 = vmatpush1.bf16.msra.mxu0 %v876
        %1031 = vmatprep.subr.bf16.mxu0 0
        %1032 = vmatpush1.bf16.msra.mxu0 %v877
        %1033 = vmatprep.subr.bf16.mxu0 0
        %1034 = vmatpush1.bf16.msra.mxu0 0
        %1035 = vmatprep.subr.bf16.mxu0 0
        %1036 = vmatpush1.bf16.msra.mxu0 0
        %1037 = vmatprep.subr.bf16.mxu0 0
        %1038 = vmatpush1.bf16.msra.mxu0 0
        %1039 = vmatprep.subr.bf16.mxu0 0
        %1040 = vmatpush1.bf16.msra.mxu0 0
        %1041 = vmatprep.subr.bf16.mxu0 0
        %1042 = vmatpush1.bf16.msra.mxu0 0
        %1043 = vmatprep.subr.bf16.mxu0 0
        %1044 = vmatpush1.bf16.msra.mxu0 0
        %1045 = vmatprep.subr.bf16.mxu0 0
        %1046 = vmatpush1.bf16.msra.mxu0 0
        %1047 = vmatprep.subr.bf16.mxu0 0
        %1048 = vmatpush1.bf16.msra.mxu0 0
        %1049 = vmatprep.subr.bf16.mxu0 0
        %1050 = vmatpush1.bf16.msra.mxu0 0
        %1051 = vmatprep.subr.bf16.mxu0 0
        %1052 = vmatpush1.bf16.msra.mxu0 0
        %1053 = vmatprep.subr.bf16.mxu0 0
        %1054 = vmatpush1.bf16.msra.mxu0 0
        %1055 = vmatprep.subr.bf16.mxu0 0
        %1056 = vmatpush1.bf16.msra.mxu0 0
        %1057 = vmatprep.subr.bf16.mxu0 0
        %1058 = vmatpush1.bf16.msra.mxu0 0
        %1059 = vmatprep.subr.bf16.mxu0 0
        %1060 = vmatpush1.bf16.msra.mxu0 0
        %1061 = vmatprep.mubr.bf16.mxu0 0
        %1062 = vmatmul.mubr.bf16.gmra.mrb[0].mxu0 %v907
        %v1063 = vpop.f32.mrb[0].mxu0
        %v1064 = vadd.f32 %v901, %v1063
        %v1065 = vpop.f32.mrb[0].mxu0
        %v1066 = vpop.f32.mrb[0].mxu0
        %v1067 = vpop.f32.mrb[0].mxu0
        %1068 = vdwg.mxu0
        %v1069 = vmul.f32 %v514, 0.35355338
        %v1070 = vmul.f32 %v554, 0.35355338
        %v1071 = vmul.f32 %v594, 0.35355338
        %v1072 = vmul.f32 %v634, 0.35355338
        %v1073 = vpack.c.bf16 %v1069, %v1069
        %v1074 = vpack.c.bf16 %v1070, %v1070
        %v1075 = vpack.c.bf16 %v1071, %v1071
        %v1076 = vpack.c.bf16 %v1072, %v1072
        %v1077 = vpack.c.bf16 %v729, %v729
        %v1078 = vpack.c.bf16 %v769, %v769
        %v1079 = vpack.c.bf16 %v809, %v809
        %v1080 = vpack.c.bf16 %v849, %v849
        %v1081 = vpack.c.bf16 %v944, %v944
        %v1082 = vpack.c.bf16 %v984, %v984
        %v1083 = vpack.c.bf16 %v1024, %v1024
        %v1084 = vpack.c.bf16 %v1064, %v1064
        %vm1085 = vcmask 64512
        %v1087 = vsel %vm1085, %v1073, 0
        %v1090 = vsel %vm1085, %v1077, 0
        %1092 = vmatprep.subr.bf16.mxu0 0
        %1093 = vmatpush1.bf16.xpose.msra.mxu0 %v1090
        %1094 = vmatprep.subr.bf16.mxu0 0
        %1095 = vmatpush1.bf16.xpose.msra.mxu0 0
        %1096 = vmatprep.subr.bf16.mxu0 0
        %1097 = vmatpush1.bf16.xpose.msra.mxu0 0
        %1098 = vmatprep.subr.bf16.mxu0 0
        %1099 = vmatpush1.bf16.xpose.msra.mxu0 0
        %1100 = vmatprep.subr.bf16.mxu0 0
        %1101 = vmatpush1.bf16.xpose.msra.mxu0 0
        %1102 = vmatprep.subr.bf16.mxu0 0
        %1103 = vmatpush1.bf16.xpose.msra.mxu0 0
        %1104 = vmatprep.subr.bf16.mxu0 0
        %1105 = vmatpush1.bf16.xpose.msra.mxu0 0
        %1106 = vmatprep.subr.bf16.mxu0 0
        %1107 = vmatpush1.bf16.xpose.msra.mxu0 0
        %1108 = vmatprep.subr.bf16.mxu0 0
        %1109 = vmatpush1.bf16.xpose.msra.mxu0 0
        %1110 = vmatprep.subr.bf16.mxu0 0
        %1111 = vmatpush1.bf16.xpose.msra.mxu0 0
        %1112 = vmatprep.subr.bf16.mxu0 0
        %1113 = vmatpush1.bf16.xpose.msra.mxu0 0
        %1114 = vmatprep.subr.bf16.mxu0 0
        %1115 = vmatpush1.bf16.xpose.msra.mxu0 0
        %1116 = vmatprep.subr.bf16.mxu0 0
        %1117 = vmatpush1.bf16.xpose.msra.mxu0 0
        %1118 = vmatprep.subr.bf16.mxu0 0
        %1119 = vmatpush1.bf16.xpose.msra.mxu0 0
        %1120 = vmatprep.subr.bf16.mxu0 0
        %1121 = vmatpush1.bf16.xpose.msra.mxu0 0
        %1122 = vmatprep.subr.bf16.mxu0 0
        %1123 = vmatpush1.bf16.xpose.msra.mxu0 0
        %1124 = vmatprep.mubr.bf16.mxu0 0
        %1125 = vmatmul.mubr.bf16.gmra.mrb[0].mxu0 %v1087
        %v1126 = vpop.f32.mrb[0].mxu0
        %v1127 = vadd.f32 0.0, %v1126
        %v1128 = vpop.f32.mrb[0].mxu0
        %v1129 = vpop.f32.mrb[0].mxu0
        %v1130 = vpop.f32.mrb[0].mxu0
        %1131 = vdwg.mxu0
        %v1133 = vsel %vm1085, %v1074, 0
        %v1136 = vsel %vm1085, %v1078, 0
        %1138 = vmatprep.subr.bf16.mxu0 0
        %1139 = vmatpush1.bf16.xpose.msra.mxu0 %v1136
        %1140 = vmatprep.subr.bf16.mxu0 0
        %1141 = vmatpush1.bf16.xpose.msra.mxu0 0
        %1142 = vmatprep.subr.bf16.mxu0 0
        %1143 = vmatpush1.bf16.xpose.msra.mxu0 0
        %1144 = vmatprep.subr.bf16.mxu0 0
        %1145 = vmatpush1.bf16.xpose.msra.mxu0 0
        %1146 = vmatprep.subr.bf16.mxu0 0
        %1147 = vmatpush1.bf16.xpose.msra.mxu0 0
        %1148 = vmatprep.subr.bf16.mxu0 0
        %1149 = vmatpush1.bf16.xpose.msra.mxu0 0
        %1150 = vmatprep.subr.bf16.mxu0 0
        %1151 = vmatpush1.bf16.xpose.msra.mxu0 0
        %1152 = vmatprep.subr.bf16.mxu0 0
        %1153 = vmatpush1.bf16.xpose.msra.mxu0 0
        %1154 = vmatprep.subr.bf16.mxu0 0
        %1155 = vmatpush1.bf16.xpose.msra.mxu0 0
        %1156 = vmatprep.subr.bf16.mxu0 0
        %1157 = vmatpush1.bf16.xpose.msra.mxu0 0
        %1158 = vmatprep.subr.bf16.mxu0 0
        %1159 = vmatpush1.bf16.xpose.msra.mxu0 0
        %1160 = vmatprep.subr.bf16.mxu0 0
        %1161 = vmatpush1.bf16.xpose.msra.mxu0 0
        %1162 = vmatprep.subr.bf16.mxu0 0
        %1163 = vmatpush1.bf16.xpose.msra.mxu0 0
        %1164 = vmatprep.subr.bf16.mxu0 0
        %1165 = vmatpush1.bf16.xpose.msra.mxu0 0
        %1166 = vmatprep.subr.bf16.mxu0 0
        %1167 = vmatpush1.bf16.xpose.msra.mxu0 0
        %1168 = vmatprep.subr.bf16.mxu0 0
        %1169 = vmatpush1.bf16.xpose.msra.mxu0 0
        %1170 = vmatprep.mubr.bf16.mxu0 0
        %1171 = vmatmul.mubr.bf16.gmra.mrb[0].mxu0 %v1133
        %v1172 = vpop.f32.mrb[0].mxu0
        %v1173 = vadd.f32 0.0, %v1172
        %v1174 = vpop.f32.mrb[0].mxu0
        %v1175 = vpop.f32.mrb[0].mxu0
        %v1176 = vpop.f32.mrb[0].mxu0
        %1177 = vdwg.mxu0
        %v1179 = vsel %vm1085, %v1075, 0
        %v1182 = vsel %vm1085, %v1079, 0
        %1184 = vmatprep.subr.bf16.mxu0 0
        %1185 = vmatpush1.bf16.xpose.msra.mxu0 %v1182
        %1186 = vmatprep.subr.bf16.mxu0 0
        %1187 = vmatpush1.bf16.xpose.msra.mxu0 0
        %1188 = vmatprep.subr.bf16.mxu0 0
        %1189 = vmatpush1.bf16.xpose.msra.mxu0 0
        %1190 = vmatprep.subr.bf16.mxu0 0
        %1191 = vmatpush1.bf16.xpose.msra.mxu0 0
        %1192 = vmatprep.subr.bf16.mxu0 0
        %1193 = vmatpush1.bf16.xpose.msra.mxu0 0
        %1194 = vmatprep.subr.bf16.mxu0 0
        %1195 = vmatpush1.bf16.xpose.msra.mxu0 0
        %1196 = vmatprep.subr.bf16.mxu0 0
        %1197 = vmatpush1.bf16.xpose.msra.mxu0 0
        %1198 = vmatprep.subr.bf16.mxu0 0
        %1199 = vmatpush1.bf16.xpose.msra.mxu0 0
        %1200 = vmatprep.subr.bf16.mxu0 0
        %1201 = vmatpush1.bf16.xpose.msra.mxu0 0
        %1202 = vmatprep.subr.bf16.mxu0 0
        %1203 = vmatpush1.bf16.xpose.msra.mxu0 0
        %1204 = vmatprep.subr.bf16.mxu0 0
        %1205 = vmatpush1.bf16.xpose.msra.mxu0 0
        %1206 = vmatprep.subr.bf16.mxu0 0
        %1207 = vmatpush1.bf16.xpose.msra.mxu0 0
        %1208 = vmatprep.subr.bf16.mxu0 0
        %1209 = vmatpush1.bf16.xpose.msra.mxu0 0
        %1210 = vmatprep.subr.bf16.mxu0 0
        %1211 = vmatpush1.bf16.xpose.msra.mxu0 0
        %1212 = vmatprep.subr.bf16.mxu0 0
        %1213 = vmatpush1.bf16.xpose.msra.mxu0 0
        %1214 = vmatprep.subr.bf16.mxu0 0
        %1215 = vmatpush1.bf16.xpose.msra.mxu0 0
        %1216 = vmatprep.mubr.bf16.mxu0 0
        %1217 = vmatmul.mubr.bf16.gmra.mrb[0].mxu0 %v1179
        %v1218 = vpop.f32.mrb[0].mxu0
        %v1219 = vadd.f32 0.0, %v1218
        %v1220 = vpop.f32.mrb[0].mxu0
        %v1221 = vpop.f32.mrb[0].mxu0
        %v1222 = vpop.f32.mrb[0].mxu0
        %1223 = vdwg.mxu0
        %v1225 = vsel %vm1085, %v1076, 0
        %v1228 = vsel %vm1085, %v1080, 0
        %1230 = vmatprep.subr.bf16.mxu0 0
        %1231 = vmatpush1.bf16.xpose.msra.mxu0 %v1228
        %1232 = vmatprep.subr.bf16.mxu0 0
        %1233 = vmatpush1.bf16.xpose.msra.mxu0 0
        %1234 = vmatprep.subr.bf16.mxu0 0
        %1235 = vmatpush1.bf16.xpose.msra.mxu0 0
        %1236 = vmatprep.subr.bf16.mxu0 0
        %1237 = vmatpush1.bf16.xpose.msra.mxu0 0
        %1238 = vmatprep.subr.bf16.mxu0 0
        %1239 = vmatpush1.bf16.xpose.msra.mxu0 0
        %1240 = vmatprep.subr.bf16.mxu0 0
        %1241 = vmatpush1.bf16.xpose.msra.mxu0 0
        %1242 = vmatprep.subr.bf16.mxu0 0
        %1243 = vmatpush1.bf16.xpose.msra.mxu0 0
        %1244 = vmatprep.subr.bf16.mxu0 0
        %1245 = vmatpush1.bf16.xpose.msra.mxu0 0
        %1246 = vmatprep.subr.bf16.mxu0 0
        %1247 = vmatpush1.bf16.xpose.msra.mxu0 0
        %1248 = vmatprep.subr.bf16.mxu0 0
        %1249 = vmatpush1.bf16.xpose.msra.mxu0 0
        %1250 = vmatprep.subr.bf16.mxu0 0
        %1251 = vmatpush1.bf16.xpose.msra.mxu0 0
        %1252 = vmatprep.subr.bf16.mxu0 0
        %1253 = vmatpush1.bf16.xpose.msra.mxu0 0
        %1254 = vmatprep.subr.bf16.mxu0 0
        %1255 = vmatpush1.bf16.xpose.msra.mxu0 0
        %1256 = vmatprep.subr.bf16.mxu0 0
        %1257 = vmatpush1.bf16.xpose.msra.mxu0 0
        %1258 = vmatprep.subr.bf16.mxu0 0
        %1259 = vmatpush1.bf16.xpose.msra.mxu0 0
        %1260 = vmatprep.subr.bf16.mxu0 0
        %1261 = vmatpush1.bf16.xpose.msra.mxu0 0
        %1262 = vmatprep.mubr.bf16.mxu0 0
        %1263 = vmatmul.mubr.bf16.gmra.mrb[0].mxu0 %v1225
        %v1264 = vpop.f32.mrb[0].mxu0
        %v1265 = vadd.f32 0.0, %v1264
        %v1266 = vpop.f32.mrb[0].mxu0
        %v1267 = vpop.f32.mrb[0].mxu0
        %v1268 = vpop.f32.mrb[0].mxu0
        %1269 = vdwg.mxu0
        %v1270 = vsel %vm1085, %v1127, -inf
        %1271 = vmax.xlane.f32.xlu0 %v1270
        %v1272 = vpop.xlane.xlu0 %1271
        %v1273 = vsel %vm1085, %v1173, -inf
        %1274 = vmax.xlane.f32.xlu0 %v1273
        %v1275 = vpop.xlane.xlu0 %1274
        %v1276 = vsel %vm1085, %v1219, -inf
        %1277 = vmax.xlane.f32.xlu0 %v1276
        %v1278 = vpop.xlane.xlu0 %1277
        %v1279 = vsel %vm1085, %v1265, -inf
        %1280 = vmax.xlane.f32.xlu0 %v1279
        %v1281 = vpop.xlane.xlu0 %1280
        %v1282 = vsub.f32 %v1127, %v1272
        %v1283 = vsub.f32 %v1173, %v1275
        %v1284 = vsub.f32 %v1219, %v1278
        %v1285 = vsub.f32 %v1265, %v1281
        %v1286 = vmul.f32 %v1282, 1.442695
        %v1287 = vpow.pop %v1286
        %v1288 = vmul.f32 %v1283, 1.442695
        %v1289 = vpow.pop %v1288
        %v1290 = vmul.f32 %v1284, 1.442695
        %v1291 = vpow.pop %v1290
        %v1292 = vmul.f32 %v1285, 1.442695
        %v1293 = vpow.pop %v1292
        %v1294 = vsel %vm1085, %v1287, 0.0
        %1295 = vadd.xlane.f32.xlu0 %v1294
        %v1296 = vpop.xlane.xlu0 %1295
        %v1297 = vsel %vm1085, %v1289, 0.0
        %1298 = vadd.xlane.f32.xlu0 %v1297
        %v1299 = vpop.xlane.xlu0 %1298
        %v1300 = vsel %vm1085, %v1291, 0.0
        %1301 = vadd.xlane.f32.xlu0 %v1300
        %v1302 = vpop.xlane.xlu0 %1301
        %v1303 = vsel %vm1085, %v1293, 0.0
        %1304 = vadd.xlane.f32.xlu0 %v1303
        %v1305 = vpop.xlane.xlu0 %1304
        %v1306 = vrcp.pop %v1296
        %v1307 = vrcp.pop %v1299
        %v1308 = vrcp.pop %v1302
        %v1309 = vrcp.pop %v1305
        %v1310 = vmul.f32 %v1287, %v1306
        %v1311 = vmul.f32 %v1289, %v1307
        %v1312 = vmul.f32 %v1291, %v1308
        %v1313 = vmul.f32 %v1293, %v1309
        %v1314 = vpack.c.bf16 %v1310, %v1310
        %v1315 = vpack.c.bf16 %v1311, %v1311
        %v1316 = vpack.c.bf16 %v1312, %v1312
        %v1317 = vpack.c.bf16 %v1313, %v1313
        %v1319 = vsel %vm1085, %v1314, 0
        %vm1321 = vcmask 1043456
        %v1323 = vsel %vm1321, %v1081, 0
        %1325 = vmatprep.subr.bf16.mxu0 0
        %1326 = vmatpush1.bf16.msra.mxu0 %v1323
        %1327 = vmatprep.subr.bf16.mxu0 0
        %1328 = vmatpush1.bf16.msra.mxu0 0
        %1329 = vmatprep.subr.bf16.mxu0 0
        %1330 = vmatpush1.bf16.msra.mxu0 0
        %1331 = vmatprep.subr.bf16.mxu0 0
        %1332 = vmatpush1.bf16.msra.mxu0 0
        %1333 = vmatprep.subr.bf16.mxu0 0
        %1334 = vmatpush1.bf16.msra.mxu0 0
        %1335 = vmatprep.subr.bf16.mxu0 0
        %1336 = vmatpush1.bf16.msra.mxu0 0
        %1337 = vmatprep.subr.bf16.mxu0 0
        %1338 = vmatpush1.bf16.msra.mxu0 0
        %1339 = vmatprep.subr.bf16.mxu0 0
        %1340 = vmatpush1.bf16.msra.mxu0 0
        %1341 = vmatprep.subr.bf16.mxu0 0
        %1342 = vmatpush1.bf16.msra.mxu0 0
        %1343 = vmatprep.subr.bf16.mxu0 0
        %1344 = vmatpush1.bf16.msra.mxu0 0
        %1345 = vmatprep.subr.bf16.mxu0 0
        %1346 = vmatpush1.bf16.msra.mxu0 0
        %1347 = vmatprep.subr.bf16.mxu0 0
        %1348 = vmatpush1.bf16.msra.mxu0 0
        %1349 = vmatprep.subr.bf16.mxu0 0
        %1350 = vmatpush1.bf16.msra.mxu0 0
        %1351 = vmatprep.subr.bf16.mxu0 0
        %1352 = vmatpush1.bf16.msra.mxu0 0
        %1353 = vmatprep.subr.bf16.mxu0 0
        %1354 = vmatpush1.bf16.msra.mxu0 0
        %1355 = vmatprep.subr.bf16.mxu0 0
        %1356 = vmatpush1.bf16.msra.mxu0 0
        %1357 = vmatprep.mubr.bf16.mxu0 0
        %1358 = vmatmul.mubr.bf16.gmra.mrb[0].mxu0 %v1319
        %v1359 = vpop.f32.mrb[0].mxu0
        %v1360 = vadd.f32 0.0, %v1359
        %v1361 = vpop.f32.mrb[0].mxu0
        %v1362 = vpop.f32.mrb[0].mxu0
        %v1363 = vpop.f32.mrb[0].mxu0
        %1364 = vdwg.mxu0
        %v1366 = vsel %vm1085, %v1315, 0
        %v1369 = vsel %vm1321, %v1082, 0
        %1371 = vmatprep.subr.bf16.mxu0 0
        %1372 = vmatpush1.bf16.msra.mxu0 %v1369
        %1373 = vmatprep.subr.bf16.mxu0 0
        %1374 = vmatpush1.bf16.msra.mxu0 0
        %1375 = vmatprep.subr.bf16.mxu0 0
        %1376 = vmatpush1.bf16.msra.mxu0 0
        %1377 = vmatprep.subr.bf16.mxu0 0
        %1378 = vmatpush1.bf16.msra.mxu0 0
        %1379 = vmatprep.subr.bf16.mxu0 0
        %1380 = vmatpush1.bf16.msra.mxu0 0
        %1381 = vmatprep.subr.bf16.mxu0 0
        %1382 = vmatpush1.bf16.msra.mxu0 0
        %1383 = vmatprep.subr.bf16.mxu0 0
        %1384 = vmatpush1.bf16.msra.mxu0 0
        %1385 = vmatprep.subr.bf16.mxu0 0
        %1386 = vmatpush1.bf16.msra.mxu0 0
        %1387 = vmatprep.subr.bf16.mxu0 0
        %1388 = vmatpush1.bf16.msra.mxu0 0
        %1389 = vmatprep.subr.bf16.mxu0 0
        %1390 = vmatpush1.bf16.msra.mxu0 0
        %1391 = vmatprep.subr.bf16.mxu0 0
        %1392 = vmatpush1.bf16.msra.mxu0 0
        %1393 = vmatprep.subr.bf16.mxu0 0
        %1394 = vmatpush1.bf16.msra.mxu0 0
        %1395 = vmatprep.subr.bf16.mxu0 0
        %1396 = vmatpush1.bf16.msra.mxu0 0
        %1397 = vmatprep.subr.bf16.mxu0 0
        %1398 = vmatpush1.bf16.msra.mxu0 0
        %1399 = vmatprep.subr.bf16.mxu0 0
        %1400 = vmatpush1.bf16.msra.mxu0 0
        %1401 = vmatprep.subr.bf16.mxu0 0
        %1402 = vmatpush1.bf16.msra.mxu0 0
        %1403 = vmatprep.mubr.bf16.mxu0 0
        %1404 = vmatmul.mubr.bf16.gmra.mrb[0].mxu0 %v1366
        %v1405 = vpop.f32.mrb[0].mxu0
        %v1406 = vadd.f32 0.0, %v1405
        %v1407 = vpop.f32.mrb[0].mxu0
        %v1408 = vpop.f32.mrb[0].mxu0
        %v1409 = vpop.f32.mrb[0].mxu0
        %1410 = vdwg.mxu0
        %v1412 = vsel %vm1085, %v1316, 0
        %v1415 = vsel %vm1321, %v1083, 0
        %1417 = vmatprep.subr.bf16.mxu0 0
        %1418 = vmatpush1.bf16.msra.mxu0 %v1415
        %1419 = vmatprep.subr.bf16.mxu0 0
        %1420 = vmatpush1.bf16.msra.mxu0 0
        %1421 = vmatprep.subr.bf16.mxu0 0
        %1422 = vmatpush1.bf16.msra.mxu0 0
        %1423 = vmatprep.subr.bf16.mxu0 0
        %1424 = vmatpush1.bf16.msra.mxu0 0
        %1425 = vmatprep.subr.bf16.mxu0 0
        %1426 = vmatpush1.bf16.msra.mxu0 0
        %1427 = vmatprep.subr.bf16.mxu0 0
        %1428 = vmatpush1.bf16.msra.mxu0 0
        %1429 = vmatprep.subr.bf16.mxu0 0
        %1430 = vmatpush1.bf16.msra.mxu0 0
        %1431 = vmatprep.subr.bf16.mxu0 0
        %1432 = vmatpush1.bf16.msra.mxu0 0
        %1433 = vmatprep.subr.bf16.mxu0 0
        %1434 = vmatpush1.bf16.msra.mxu0 0
        %1435 = vmatprep.subr.bf16.mxu0 0
        %1436 = vmatpush1.bf16.msra.mxu0 0
        %1437 = vmatprep.subr.bf16.mxu0 0
        %1438 = vmatpush1.bf16.msra.mxu0 0
        %1439 = vmatprep.subr.bf16.mxu0 0
        %1440 = vmatpush1.bf16.msra.mxu0 0
        %1441 = vmatprep.subr.bf16.mxu0 0
        %1442 = vmatpush1.bf16.msra.mxu0 0
        %1443 = vmatprep.subr.bf16.mxu0 0
        %1444 = vmatpush1.bf16.msra.mxu0 0
        %1445 = vmatprep.subr.bf16.mxu0 0
        %1446 = vmatpush1.bf16.msra.mxu0 0
        %1447 = vmatprep.subr.bf16.mxu0 0
        %1448 = vmatpush1.bf16.msra.mxu0 0
        %1449 = vmatprep.mubr.bf16.mxu0 0
        %1450 = vmatmul.mubr.bf16.gmra.mrb[0].mxu0 %v1412
        %v1451 = vpop.f32.mrb[0].mxu0
        %v1452 = vadd.f32 0.0, %v1451
        %v1453 = vpop.f32.mrb[0].mxu0
        %v1454 = vpop.f32.mrb[0].mxu0
        %v1455 = vpop.f32.mrb[0].mxu0
        %1456 = vdwg.mxu0
        %v1458 = vsel %vm1085, %v1317, 0
        %v1461 = vsel %vm1321, %v1084, 0
        %1463 = vmatprep.subr.bf16.mxu0 0
        %1464 = vmatpush1.bf16.msra.mxu0 %v1461
        %1465 = vmatprep.subr.bf16.mxu0 0
        %1466 = vmatpush1.bf16.msra.mxu0 0
        %1467 = vmatprep.subr.bf16.mxu0 0
        %1468 = vmatpush1.bf16.msra.mxu0 0
        %1469 = vmatprep.subr.bf16.mxu0 0
        %1470 = vmatpush1.bf16.msra.mxu0 0
        %1471 = vmatprep.subr.bf16.mxu0 0
        %1472 = vmatpush1.bf16.msra.mxu0 0
        %1473 = vmatprep.subr.bf16.mxu0 0
        %1474 = vmatpush1.bf16.msra.mxu0 0
        %1475 = vmatprep.subr.bf16.mxu0 0
        %1476 = vmatpush1.bf16.msra.mxu0 0
        %1477 = vmatprep.subr.bf16.mxu0 0
        %1478 = vmatpush1.bf16.msra.mxu0 0
        %1479 = vmatprep.subr.bf16.mxu0 0
        %1480 = vmatpush1.bf16.msra.mxu0 0
        %1481 = vmatprep.subr.bf16.mxu0 0
        %1482 = vmatpush1.bf16.msra.mxu0 0
        %1483 = vmatprep.subr.bf16.mxu0 0
        %1484 = vmatpush1.bf16.msra.mxu0 0
        %1485 = vmatprep.subr.bf16.mxu0 0
        %1486 = vmatpush1.bf16.msra.mxu0 0
        %1487 = vmatprep.subr.bf16.mxu0 0
        %1488 = vmatpush1.bf16.msra.mxu0 0
        %1489 = vmatprep.subr.bf16.mxu0 0
        %1490 = vmatpush1.bf16.msra.mxu0 0
        %1491 = vmatprep.subr.bf16.mxu0 0
        %1492 = vmatpush1.bf16.msra.mxu0 0
        %1493 = vmatprep.subr.bf16.mxu0 0
        %1494 = vmatpush1.bf16.msra.mxu0 0
        %1495 = vmatprep.mubr.bf16.mxu0 0
        %1496 = vmatmul.mubr.bf16.gmra.mrb[0].mxu0 %v1458
        %v1497 = vpop.f32.mrb[0].mxu0
        %v1498 = vadd.f32 0.0, %v1497
        %v1499 = vpop.f32.mrb[0].mxu0
        %v1500 = vpop.f32.mrb[0].mxu0
        %v1501 = vpop.f32.mrb[0].mxu0
        %1502 = vdwg.mxu0
        %v1503 = vpack.c.bf16 %v1360, %v1360
        %v1504 = vpack.c.bf16 %v1406, %v1406
        %v1505 = vpack.c.bf16 %v1452, %v1452
        %v1506 = vpack.c.bf16 %v1498, %v1498
        %v1507 = vld [vmem:[%s9] sm:$0xff]
        %v1508 = vld [vmem:[%s9 + $0x8] sm:$0xff]
        %v1509 = vld [vmem:[%s9 + $0x10] sm:$0xff]
        %v1510 = vld [vmem:[%s9 + $0x18] sm:$0xff]
        %v1511 = vpack.c.bf16 %v1507, %v1507
        %v1512 = vpack.c.bf16 %v1508, %v1508
        %v1513 = vpack.c.bf16 %v1509, %v1509
        %v1514 = vpack.c.bf16 %v1510, %v1510
        %v1516 = vsel %vm1085, %v1503, 0
        %v1519 = vsel %vm1321, %v1511, 0
        %1521 = vmatprep.subr.bf16.mxu0 0
        %1522 = vmatpush1.bf16.msra.mxu0 %v1519
        %1523 = vmatprep.subr.bf16.mxu0 0
        %1524 = vmatpush1.bf16.msra.mxu0 0
        %1525 = vmatprep.subr.bf16.mxu0 0
        %1526 = vmatpush1.bf16.msra.mxu0 0
        %1527 = vmatprep.subr.bf16.mxu0 0
        %1528 = vmatpush1.bf16.msra.mxu0 0
        %1529 = vmatprep.subr.bf16.mxu0 0
        %1530 = vmatpush1.bf16.msra.mxu0 0
        %1531 = vmatprep.subr.bf16.mxu0 0
        %1532 = vmatpush1.bf16.msra.mxu0 0
        %1533 = vmatprep.subr.bf16.mxu0 0
        %1534 = vmatpush1.bf16.msra.mxu0 0
        %1535 = vmatprep.subr.bf16.mxu0 0
        %1536 = vmatpush1.bf16.msra.mxu0 0
        %1537 = vmatprep.subr.bf16.mxu0 0
        %1538 = vmatpush1.bf16.msra.mxu0 0
        %1539 = vmatprep.subr.bf16.mxu0 0
        %1540 = vmatpush1.bf16.msra.mxu0 0
        %1541 = vmatprep.subr.bf16.mxu0 0
        %1542 = vmatpush1.bf16.msra.mxu0 0
        %1543 = vmatprep.subr.bf16.mxu0 0
        %1544 = vmatpush1.bf16.msra.mxu0 0
        %1545 = vmatprep.subr.bf16.mxu0 0
        %1546 = vmatpush1.bf16.msra.mxu0 0
        %1547 = vmatprep.subr.bf16.mxu0 0
        %1548 = vmatpush1.bf16.msra.mxu0 0
        %1549 = vmatprep.subr.bf16.mxu0 0
        %1550 = vmatpush1.bf16.msra.mxu0 0
        %1551 = vmatprep.subr.bf16.mxu0 0
        %1552 = vmatpush1.bf16.msra.mxu0 0
        %1553 = vmatprep.mubr.bf16.mxu0 0
        %1554 = vmatmul.mubr.bf16.gmra.mrb[0].mxu0 %v1516
        %v1555 = vpop.f32.mrb[0].mxu0
        %v1556 = vadd.f32 0.0, %v1555
        %v1557 = vpop.f32.mrb[0].mxu0
        %v1558 = vpop.f32.mrb[0].mxu0
        %v1559 = vpop.f32.mrb[0].mxu0
        %1560 = vdwg.mxu0
        %v1562 = vsel %vm1085, %v1504, 0
        %v1565 = vsel %vm1321, %v1512, 0
        %1567 = vmatprep.subr.bf16.mxu0 0
        %1568 = vmatpush1.bf16.msra.mxu0 %v1565
        %1569 = vmatprep.subr.bf16.mxu0 0
        %1570 = vmatpush1.bf16.msra.mxu0 0
        %1571 = vmatprep.subr.bf16.mxu0 0
        %1572 = vmatpush1.bf16.msra.mxu0 0
        %1573 = vmatprep.subr.bf16.mxu0 0
        %1574 = vmatpush1.bf16.msra.mxu0 0
        %1575 = vmatprep.subr.bf16.mxu0 0
        %1576 = vmatpush1.bf16.msra.mxu0 0
        %1577 = vmatprep.subr.bf16.mxu0 0
        %1578 = vmatpush1.bf16.msra.mxu0 0
        %1579 = vmatprep.subr.bf16.mxu0 0
        %1580 = vmatpush1.bf16.msra.mxu0 0
        %1581 = vmatprep.subr.bf16.mxu0 0
        %1582 = vmatpush1.bf16.msra.mxu0 0
        %1583 = vmatprep.subr.bf16.mxu0 0
        %1584 = vmatpush1.bf16.msra.mxu0 0
        %1585 = vmatprep.subr.bf16.mxu0 0
        %1586 = vmatpush1.bf16.msra.mxu0 0
        %1587 = vmatprep.subr.bf16.mxu0 0
        %1588 = vmatpush1.bf16.msra.mxu0 0
        %1589 = vmatprep.subr.bf16.mxu0 0
        %1590 = vmatpush1.bf16.msra.mxu0 0
        %1591 = vmatprep.subr.bf16.mxu0 0
        %1592 = vmatpush1.bf16.msra.mxu0 0
        %1593 = vmatprep.subr.bf16.mxu0 0
        %1594 = vmatpush1.bf16.msra.mxu0 0
        %1595 = vmatprep.subr.bf16.mxu0 0
        %1596 = vmatpush1.bf16.msra.mxu0 0
        %1597 = vmatprep.subr.bf16.mxu0 0
        %1598 = vmatpush1.bf16.msra.mxu0 0
        %1599 = vmatprep.mubr.bf16.mxu0 0
        %1600 = vmatmul.mubr.bf16.gmra.mrb[0].mxu0 %v1562
        %v1601 = vpop.f32.mrb[0].mxu0
        %v1602 = vadd.f32 0.0, %v1601
        %v1603 = vpop.f32.mrb[0].mxu0
        %v1604 = vpop.f32.mrb[0].mxu0
        %v1605 = vpop.f32.mrb[0].mxu0
        %1606 = vdwg.mxu0
        %v1608 = vsel %vm1085, %v1505, 0
        %v1611 = vsel %vm1321, %v1513, 0
        %1613 = vmatprep.subr.bf16.mxu0 0
        %1614 = vmatpush1.bf16.msra.mxu0 %v1611
        %1615 = vmatprep.subr.bf16.mxu0 0
        %1616 = vmatpush1.bf16.msra.mxu0 0
        %1617 = vmatprep.subr.bf16.mxu0 0
        %1618 = vmatpush1.bf16.msra.mxu0 0
        %1619 = vmatprep.subr.bf16.mxu0 0
        %1620 = vmatpush1.bf16.msra.mxu0 0
        %1621 = vmatprep.subr.bf16.mxu0 0
        %1622 = vmatpush1.bf16.msra.mxu0 0
        %1623 = vmatprep.subr.bf16.mxu0 0
        %1624 = vmatpush1.bf16.msra.mxu0 0
        %1625 = vmatprep.subr.bf16.mxu0 0
        %1626 = vmatpush1.bf16.msra.mxu0 0
        %1627 = vmatprep.subr.bf16.mxu0 0
        %1628 = vmatpush1.bf16.msra.mxu0 0
        %1629 = vmatprep.subr.bf16.mxu0 0
        %1630 = vmatpush1.bf16.msra.mxu0 0
        %1631 = vmatprep.subr.bf16.mxu0 0
        %1632 = vmatpush1.bf16.msra.mxu0 0
        %1633 = vmatprep.subr.bf16.mxu0 0
        %1634 = vmatpush1.bf16.msra.mxu0 0
        %1635 = vmatprep.subr.bf16.mxu0 0
        %1636 = vmatpush1.bf16.msra.mxu0 0
        %1637 = vmatprep.subr.bf16.mxu0 0
        %1638 = vmatpush1.bf16.msra.mxu0 0
        %1639 = vmatprep.subr.bf16.mxu0 0
        %1640 = vmatpush1.bf16.msra.mxu0 0
        %1641 = vmatprep.subr.bf16.mxu0 0
        %1642 = vmatpush1.bf16.msra.mxu0 0
        %1643 = vmatprep.subr.bf16.mxu0 0
        %1644 = vmatpush1.bf16.msra.mxu0 0
        %1645 = vmatprep.mubr.bf16.mxu0 0
        %1646 = vmatmul.mubr.bf16.gmra.mrb[0].mxu0 %v1608
        %v1647 = vpop.f32.mrb[0].mxu0
        %v1648 = vadd.f32 0.0, %v1647
        %v1649 = vpop.f32.mrb[0].mxu0
        %v1650 = vpop.f32.mrb[0].mxu0
        %v1651 = vpop.f32.mrb[0].mxu0
        %1652 = vdwg.mxu0
        %v1654 = vsel %vm1085, %v1506, 0
        %v1657 = vsel %vm1321, %v1514, 0
        %1659 = vmatprep.subr.bf16.mxu0 0
        %1660 = vmatpush1.bf16.msra.mxu0 %v1657
        %1661 = vmatprep.subr.bf16.mxu0 0
        %1662 = vmatpush1.bf16.msra.mxu0 0
        %1663 = vmatprep.subr.bf16.mxu0 0
        %1664 = vmatpush1.bf16.msra.mxu0 0
        %1665 = vmatprep.subr.bf16.mxu0 0
        %1666 = vmatpush1.bf16.msra.mxu0 0
        %1667 = vmatprep.subr.bf16.mxu0 0
        %1668 = vmatpush1.bf16.msra.mxu0 0
        %1669 = vmatprep.subr.bf16.mxu0 0
        %1670 = vmatpush1.bf16.msra.mxu0 0
        %1671 = vmatprep.subr.bf16.mxu0 0
        %1672 = vmatpush1.bf16.msra.mxu0 0
        %1673 = vmatprep.subr.bf16.mxu0 0
        %1674 = vmatpush1.bf16.msra.mxu0 0
        %1675 = vmatprep.subr.bf16.mxu0 0
        %1676 = vmatpush1.bf16.msra.mxu0 0
        %1677 = vmatprep.subr.bf16.mxu0 0
        %1678 = vmatpush1.bf16.msra.mxu0 0
        %1679 = vmatprep.subr.bf16.mxu0 0
        %1680 = vmatpush1.bf16.msra.mxu0 0
        %1681 = vmatprep.subr.bf16.mxu0 0
        %1682 = vmatpush1.bf16.msra.mxu0 0
        %1683 = vmatprep.subr.bf16.mxu0 0
        %1684 = vmatpush1.bf16.msra.mxu0 0
        %1685 = vmatprep.subr.bf16.mxu0 0
        %1686 = vmatpush1.bf16.msra.mxu0 0
        %1687 = vmatprep.subr.bf16.mxu0 0
        %1688 = vmatpush1.bf16.msra.mxu0 0
        %1689 = vmatprep.subr.bf16.mxu0 0
        %1690 = vmatpush1.bf16.msra.mxu0 0
        %1691 = vmatprep.mubr.bf16.mxu0 0
        %1692 = vmatmul.mubr.bf16.gmra.mrb[0].mxu0 %v1654
        %v1693 = vpop.f32.mrb[0].mxu0
        %v1694 = vadd.f32 0.0, %v1693
        %v1695 = vpop.f32.mrb[0].mxu0
        %v1696 = vpop.f32.mrb[0].mxu0
        %v1697 = vpop.f32.mrb[0].mxu0
        %1698 = vdwg.mxu0
        %v1699 = vsel %vm475, %v1556, 0.0
        %v1700 = vsel %vm475, %v1602, 0.0
        %v1701 = vadd.f32 %v1699, %v1700
        %v1702 = vsel %vm475, %v1648, 0.0
        %v1703 = vadd.f32 %v1701, %v1702
        %v1704 = vsel %vm475, %v1694, 0.0
        %v1705 = vadd.f32 %v1703, %v1704
        %v1706 = vld [vmem:[%s10] sm:$0x1]
        %v1708 = vlaneseq
        %v1709 = vshrl.u32 %v1708, 7
        %v1710 = vsub.s32 0, %v1709
        %v1711 = vrot.slane %v1706, %v1710
        %v1713 = vadd.f32 %v1705, %v1711
        %1714 = vst.msk [vmem:[%s403] sm:$0xff] %vm475, %v1713
        %s1715 = sand.u32 %s279, 1
        %s1716 = scalar_lea.sflag [#allocation3], %s1715
        %s1717 = sand.u32 %s279, 1
        %s1718 = smul.addr %s1717, 8
        %s1719 = scalar_lea.vmem [#allocation2], %s1718
        // Predicated region
        $region65: #{cross_attention_layer.1} parent=63 // pred_check
          %p1720 = pneg %p289
        $region66: #{cross_attention_layer.1} parent=63 // pred_check_branch
          %1722 = sbr.rel (%p1720) target = $region68
        $region67: #{cross_attention_layer.1} parent=63 // pred_region
          %s1724 = ssub.s32 128, 128
          %1725 = vsyncadd %s1716, %s1724
          %s1726 = smul.addr %s25, 128
          %s1727 = scalar_lea.hbm %s11, %s1726
          %s1729 = sshll.u32 %s1719, 4
          %s1730 = int_to_ptr.vmem [resolvable:$true] %s1729
          %1732 = dma.vmem_to_hbm [thread:$0]  %s1730, 128, %s1727, %s1716
        $region68: #{cross_attention_layer.1} parent=63 // pred_fallthru
          _
      $region64: #{cross_attention_layer.1} parent=5 // pred_fallthru
        _
      %p1733 = scmp.le.s32.totalorder 2, %s20
      // Predicated region
      $region69: #{cross_attention_layer.1} parent=5 // pred_check
        %p1734 = pneg %p1733
      $region70: #{cross_attention_layer.1} parent=5 // pred_check_branch
        %1736 = sbr.rel (%p1734) target = $region72
      $region71: #{cross_attention_layer.1} parent=5 // pred_region
        %s1737 = ssub.s32 %s20, 2
        // Predicated region
        $region73: #{cross_attention_layer.1} parent=71 // pred_check
          %p1738 = pneg %p295
        $region74: #{cross_attention_layer.1} parent=71 // pred_check_branch
          %1740 = sbr.rel (%p1738) target = $region76
        $region75: #{cross_attention_layer.1} parent=71 // pred_region
          %s1741 = sand.u32 %s280, 1
          %s1742 = scalar_lea.sflag [#allocation3], %s1741
          %s1743 = sand.u32 %s280, 1
          %s1744 = smul.addr %s1743, 8
          %s1745 = scalar_lea.vmem [#allocation2], %s1744
          %1746 = dma.done %s1742, 128
        $region76: #{cross_attention_layer.1} parent=71 // pred_fallthru
          _
      $region72: #{cross_attention_layer.1} parent=5 // pred_fallthru
        _
    $region6: #{cross_attention_layer.1} parent=1 // loop_footer
      %s24 = sadd.s32 1, %s20
    $region7: #{cross_attention_layer.1} parent=1 // loop_footer_branch
      %19 = sbr.rel target = $region3
    $region8: #{cross_attention_layer.1} parent=1 // loop_exit
      _
    %1747 = vsyncpa [#allocation3], 1
    %s1748 = scalar_lea.sflag [#allocation3], 1
    %1749 = vsyncpa %s1748, 1

</llo_original>
